<compile_context>
chip_gen: v7x
topology: tpu7x:2x2x1
jax: 0.10.0
libtpu: 0.0.40
codegen_flags: <defaults>
</compile_context>

<pallas_src>
import functools

import jax
import jax.numpy as jnp
from jax.experimental import pallas as pl
from jax.experimental.pallas import tpu as pltpu

_HIGHEST = jax.lax.Precision.HIGHEST


# -----------------------------------------------------------------------------
# Helpers
# -----------------------------------------------------------------------------
def _pick_rows(h, w, max_pixels, max_rows):
    """Largest row-tile TH | h with TH <= max_rows, TH*w <= max_pixels and lane-aligned."""
    cands = [t for t in range(1, h + 1)
             if h % t == 0 and t <= max_rows and t * w <= max_pixels
             and ((t * w) % 128 == 0 or t == h)]
    return max(cands) if cands else h


def _col_routing(width, factor):
    """G[j][w, w*factor + j] = 1  (exact 0/1, stored in bf16)."""
    cols = jnp.arange(width) * factor
    mats = [jax.nn.one_hot(cols + j, width * factor, dtype=jnp.float32)
            for j in range(factor)]
    return jnp.stack(mats, axis=0).astype(jnp.bfloat16)        # (f, W, W*f)


# -----------------------------------------------------------------------------
# Kernel 1: BatchNorm -> LeakyReLU -> ConvTranspose2d(k=stride=f)  (+ e), fused.
# -----------------------------------------------------------------------------
def _upsample_add_kernel(x_ref, scale_ref, shift_ref, w_ref, g_ref, b_ref,
                         e_ref, o_ref, *, factor, cout, tile_rows, width,
                         negative_slope):
    # x_ref:     (1, Cin, TH*W)        TH input rows, pixels on lanes (NCHW order)
    # scale_ref: (Cin, 1), shift_ref: (Cin, 1)   fused eval-mode BN
    # w_ref:     (f*f*Cout, Cin)       phase-major stacked transposed-conv weights
    # g_ref:     (f, W, W*f)           bf16 per-row column-interleave routing
    # b_ref:     (Cout, 1)             conv bias
    # e_ref:     (1, Cout, TH*f*f*W)   encoder skip tile (upsampled resolution)
    # o_ref:     (1, Cout, TH*f*f*W)   output tile, already in NCHW pixel order
    f = factor
    wf = width * f
    x = x_ref[0].astype(jnp.float32)
    y = x * scale_ref[...] + shift_ref[...]
    y = jnp.where(y >= 0, y, negative_slope * y)

    # One fused channel matmul over all f*f phases (M = f*f*Cout).
    z = jnp.dot(w_ref[...], y, preferred_element_type=jnp.float32,
                precision=_HIGHEST)                            # (f*f*Cout, TH*W)

    chunks = []
    for i in range(f):
        acc = None
        for j in range(f):
            p = i * f + j
            zp = z[p * cout:(p + 1) * cout, :]                 # (Cout, TH*W)
            zp = zp.reshape(cout * tile_rows, width)           # rows -> sublanes
            # exact bf16 hi/lo split -> two single-pass MXU matmuls, f32 accumulate
            zh = zp.astype(jnp.bfloat16)
            zl = (zp - zh.astype(jnp.float32)).astype(jnp.bfloat16)
            g = g_ref[j]                                       # (W, Wf) bf16 0/1
            r = (jnp.dot(zh, g, preferred_element_type=jnp.float32)
                 + jnp.dot(zl, g, preferred_element_type=jnp.float32))
            acc = r if acc is None else acc + r                # (Cout*TH, Wf)
        chunks.append(acc)
    out = jnp.concatenate(chunks, axis=-1)                     # (Cout*TH, f*Wf)
    out = out.reshape(cout, tile_rows * f * wf)                # NCHW flat pixel order
    out = out + b_ref[...] + e_ref[0].astype(jnp.float32)
    o_ref[0] = out.astype(o_ref.dtype)


def upsample_add_forward(x, e, up, *, factor, negative_slope=0.01, eps=1e-5,
                         max_tile_pixels=1024, max_tile_rows=64):
    """Fused _Upsample.forward(x) + e.  Returns (N, Cout, Hf*Wf) in NCHW order."""
    n, cin, h, w = x.shape
    cout = up["weight"].shape[1]
    f = factor
    hf, wf = h * f, w * f

    scale = (up["gamma"] / jnp.sqrt(up["running_var"] + eps)).reshape(cin, 1)
    shift = (up["beta"] - up["running_mean"] * scale[:, 0]).reshape(cin, 1)
    # torch ConvTranspose2d weight (Cin, Cout, f, f) -> (f*f*Cout, Cin), phase-major rows.
    wstack = jnp.transpose(up["weight"], (2, 3, 1, 0)).reshape(f * f * cout, cin)
    bias = up["bias"].reshape(cout, 1)
    g = _col_routing(w, f)

    th = _pick_rows(h, w, max_tile_pixels, max_tile_rows)
    tw = th * w                       # input pixels per tile
    tq = th * f * f * w               # output pixels per tile

    x3 = x.reshape(n, cin, h * w)     # free views of NCHW storage
    e3 = e.reshape(n, cout, hf * wf)
    grid = (n, h // th)

    kernel = functools.partial(_upsample_add_kernel, factor=f, cout=cout,
                               tile_rows=th, width=w,
                               negative_slope=negative_slope)
    out3 = pl.pallas_call(
        kernel,
        out_shape=jax.ShapeDtypeStruct((n, cout, hf * wf), x.dtype),
        grid=grid,
        in_specs=[
            pl.BlockSpec((1, cin, tw), lambda ni, hb: (ni, 0, hb)),
            pl.BlockSpec((cin, 1), lambda ni, hb: (0, 0)),
            pl.BlockSpec((cin, 1), lambda ni, hb: (0, 0)),
            pl.BlockSpec((f * f * cout, cin), lambda ni, hb: (0, 0)),
            pl.BlockSpec((f, w, wf), lambda ni, hb: (0, 0, 0)),
            pl.BlockSpec((cout, 1), lambda ni, hb: (0, 0)),
            pl.BlockSpec((1, cout, tq), lambda ni, hb: (ni, 0, hb)),
        ],
        out_specs=pl.BlockSpec((1, cout, tq), lambda ni, hb: (ni, 0, hb)),
        compiler_params=pltpu.CompilerParams(
            dimension_semantics=("parallel", "parallel")),
    )(x3, scale, shift, wstack, g, bias, e3)
    return out3


# -----------------------------------------------------------------------------
# Kernel 2: 4x _RCBlock, fused, row-block tiled with an 8-row halo.
#   out = Conv1x1(x) + Conv3x3(act(BN(Conv3x3(act(BN(x))))))   (x4, chained)
# -----------------------------------------------------------------------------
def _rcblocks_kernel(x_hbm, s1_ref, h1_ref, w1_ref, b1_ref, s2_ref, h2_ref,
                     w2_ref, b2_ref, ws_ref, bs_ref, o_ref, xbuf, *,
                     num_blocks, channels, negative_slope, row_width,
                     tile_rows, halo, img_rows):
    wf = row_width
    r = tile_rows + 2 * halo
    pix = r * wf
    ni = pl.program_id(0)
    rbi = pl.program_id(1)
    off = pl.multiple_of(rbi * tile_rows * wf, 128)

    # Manual fetch of the halo'd window (channels + 2 index channels) into VMEM.
    pltpu.sync_copy(x_hbm.at[ni, :, pl.ds(off, pix)], xbuf)

    buf = xbuf[...].astype(jnp.float32)                    # (C+2, R*Wf)
    x = buf[:channels, :]
    grow = buf[channels:channels + 1, :]                   # global image row of pixel
    gcol = buf[channels + 1:channels + 2, :]               # image column of pixel

    # 3x3 tap masks, built in-kernel: neighbor (row+dh, col+dw) must lie in the image.
    masks = []
    for dh in (-1, 0, 1):
        rv = (grow + dh >= 0) & (grow + dh < img_rows)
        for dw in (-1, 0, 1):
            cv = (gcol + dw >= 0) & (gcol + dw < wf)
            masks.append((rv & cv).astype(jnp.float32))    # (1, R*Wf)

    def act(v):
        return jnp.where(v >= 0, v, negative_slope * v)

    def conv3x3(t, w_flat):
        # t: (Ci, P); w_flat: (Co, 9*Ci) with columns ordered (kh, kw, ci).
        parts = []
        for di, dh in enumerate((-1, 0, 1)):
            t_dh = t if dh == 0 else pltpu.roll(t, (-dh * wf) % pix, 1)
            for dj, dw in enumerate((-1, 0, 1)):
                ts = t_dh if dw == 0 else pltpu.roll(t_dh, (-dw) % pix, 1)
                parts.append(ts * masks[di * 3 + dj])
        big = jnp.concatenate(parts, axis=0)               # (9*Ci, P)
        return jnp.dot(w_flat, big, preferred_element_type=jnp.float32,
                       precision=_HIGHEST)

    for b in range(num_blocks):
        t = act(x * s1_ref[b] + h1_ref[b])                 # BN1 + act
        u = conv3x3(t, w1_ref[b]) + b1_ref[b]              # Conv3x3 C -> inner
        v = act(u * s2_ref[b] + h2_ref[b])                 # BN2 + act
        cpath = conv3x3(v, w2_ref[b]) + b2_ref[b]          # Conv3x3 inner -> C
        skip = jnp.dot(ws_ref[b], x, preferred_element_type=jnp.float32,
                       precision=_HIGHEST) + bs_ref[b]     # Conv1x1 skip
        x = skip + cpath

    # Only the central TR rows of the halo'd window are valid after 2*num_blocks convs.
    o_ref[0] = x[:, halo * wf:(halo + tile_rows) * wf].astype(o_ref.dtype)


def rcblocks_forward(x3, blocks, hf, wf, *, negative_slope=0.01, eps=1e-5,
                     max_tile_rows=None):
    """Runs the _RCBlock chain on x3 = (N, C, Hf*Wf) (NCHW order), returns same shape."""
    n, c, pix = x3.shape
    assert pix == hf * wf
    nb = len(blocks)
    inner = blocks[0]["conv1_w"].shape[0]
    halo = 2 * nb                           # row receptive-field radius of the chain

    if max_tile_rows is None:               # crude VMEM budget (~20 MiB of temporaries)
        per_row = (18 * max(c, inner) + 4 * (c + 2)) * wf * 4
        max_tile_rows = max(1, (20 << 20) // per_row)
    tr = _pick_rows(hf, wf, hf * wf, max_tile_rows)
    rblocks = hf // tr
    r = tr + 2 * halo
    hp = hf + 2 * halo

    def fuse_bn(g, b, m, v):
        s = g / jnp.sqrt(v + eps)
        return s, b - m * s

    s1, h1, w1, b1, s2, h2, w2, b2, ws, bs = ([] for _ in range(10))
    for p in blocks:
        s, sh = fuse_bn(p["bn1_gamma"], p["bn1_beta"], p["bn1_mean"], p["bn1_var"])
        s1.append(s); h1.append(sh)
        w1.append(jnp.transpose(p["conv1_w"], (0, 2, 3, 1)).reshape(inner, 9 * c))
        b1.append(p["conv1_b"])
        s, sh = fuse_bn(p["bn2_gamma"], p["bn2_beta"], p["bn2_mean"], p["bn2_var"])
        s2.append(s); h2.append(sh)
        w2.append(jnp.transpose(p["conv2_w"], (0, 2, 3, 1)).reshape(c, 9 * inner))
        b2.append(p["conv2_b"])
        ws.append(p["skip_w"].reshape(c, c))
        bs.append(p["skip_b"])

    s1 = jnp.stack(s1).reshape(nb, c, 1)
    h1 = jnp.stack(h1).reshape(nb, c, 1)
    w1 = jnp.stack(w1)                      # (nb, inner, 9*c)
    b1 = jnp.stack(b1).reshape(nb, inner, 1)
    s2 = jnp.stack(s2).reshape(nb, inner, 1)
    h2 = jnp.stack(h2).reshape(nb, inner, 1)
    w2 = jnp.stack(w2)                      # (nb, c, 9*inner)
    b2 = jnp.stack(b2).reshape(nb, c, 1)
    ws = jnp.stack(ws)                      # (nb, c, c)
    bs = jnp.stack(bs).reshape(nb, c, 1)

    # Halo-padded input with two appended index channels (global row / column) so that
    # tile-aware boundary masks are rebuilt in-kernel instead of shipping 9 mask planes.
    dt = x3.dtype
    x4 = x3.reshape(n, c, hf, wf)
    xpad = jnp.pad(x4, ((0, 0), (0, 0), (halo, halo), (0, 0)))
    rowmap = jnp.broadcast_to((jnp.arange(hp, dtype=dt) - halo)[:, None], (hp, wf))
    colmap = jnp.broadcast_to(jnp.arange(wf, dtype=dt)[None, :], (hp, wf))
    aux = jnp.broadcast_to(jnp.stack([rowmap, colmap], axis=0)[None], (n, 2, hp, wf))
    xaug = jnp.concatenate([xpad, aux], axis=1).reshape(n, c + 2, hp * wf)

    def const3(shape):
        return pl.BlockSpec(shape, lambda ni, rbi: (0, 0, 0))

    kernel = functools.partial(_rcblocks_kernel, num_blocks=nb, channels=c,
                               negative_slope=negative_slope, row_width=wf,
                               tile_rows=tr, halo=halo, img_rows=hf)

    out3 = pl.pallas_call(
        kernel,
        out_shape=jax.ShapeDtypeStruct((n, c, pix), x3.dtype),
        grid=(n, rblocks),
        in_specs=[
            pl.BlockSpec(memory_space=pl.ANY),      # halo'd x (+index channels), manual DMA
            const3((nb, c, 1)),
            const3((nb, c, 1)),
            const3((nb, inner, 9 * c)),
            const3((nb, inner, 1)),
            const3((nb, inner, 1)),
            const3((nb, inner, 1)),
            const3((nb, c, 9 * inner)),
            const3((nb, c, 1)),
            const3((nb, c, c)),
            const3((nb, c, 1)),
        ],
        out_specs=pl.BlockSpec((1, c, tr * wf), lambda ni, rbi: (ni, 0, rbi)),
        scratch_shapes=[pltpu.VMEM((c + 2, r * wf), x3.dtype)],
        compiler_params=pltpu.CompilerParams(
            dimension_semantics=("parallel", "parallel")),
    )(xaug, s1, h1, w1, b1, s2, h2, w2, b2, ws, bs)
    return out3


# -----------------------------------------------------------------------------
# Full _RDBlock forward.
# -----------------------------------------------------------------------------
def rdblock_forward(x, e, params, *, factor=2, negative_slope=0.01, eps=1e-5,
                    max_tile_pixels=1024, rc_max_tile_rows=None):
    n, _, h, w = x.shape
    cout = params["upsample"]["weight"].shape[1]
    hf, wf = h * factor, w * factor
    x1 = upsample_add_forward(x, e, params["upsample"], factor=factor,
                              negative_slope=negative_slope, eps=eps,
                              max_tile_pixels=max_tile_pixels)
    out3 = rcblocks_forward(x1, params["blocks"], hf, wf,
                            negative_slope=negative_slope, eps=eps,
                            max_tile_rows=rc_max_tile_rows)
    return out3.reshape(n, cout, hf, wf)     # free reshape, already NCHW order


# -----------------------------------------------------------------------------
# Pure-JAX reference (identical eval-mode math) for the correctness check.
# -----------------------------------------------------------------------------
def _reference_rdblock(x, e, params, *, factor=2, negative_slope=0.01, eps=1e-5):
    hp = _HIGHEST

    def bn(v, g, b, m, var):
        return ((v - m[None, :, None, None])
                / jnp.sqrt(var[None, :, None, None] + eps)
                * g[None, :, None, None] + b[None, :, None, None])

    def act(v):
        return jnp.where(v >= 0, v, negative_slope * v)

    up = params["upsample"]
    t = act(bn(x, up["gamma"], up["beta"], up["running_mean"], up["running_var"]))
    y = jnp.einsum("nchw,cdij->ndhiwj", t, up["weight"], precision=hp)
    nb_, cd_, hh_, ff_, ww_, _ = y.shape
    y = y.reshape(nb_, cd_, hh_ * ff_, ww_ * ff_) + up["bias"][None, :, None, None]
    xin = y + e

    dn = ("NCHW", "OIHW", "NCHW")
    for p in params["blocks"]:
        t1 = act(bn(xin, p["bn1_gamma"], p["bn1_beta"], p["bn1_mean"], p["bn1_var"]))
        u = jax.lax.conv_general_dilated(t1, p["conv1_w"], (1, 1), "SAME",
                                         dimension_numbers=dn, precision=hp)
        u = u + p["conv1_b"][None, :, None, None]
        v = act(bn(u, p["bn2_gamma"], p["bn2_beta"], p["bn2_mean"], p["bn2_var"]))
        cv = jax.lax.conv_general_dilated(v, p["conv2_w"], (1, 1), "SAME",
                                          dimension_numbers=dn, precision=hp)
        cv = cv + p["conv2_b"][None, :, None, None]
        skip = jnp.einsum("oc,nchw->nohw",
                          p["skip_w"].reshape(p["skip_w"].shape[0], -1), xin,
                          precision=hp) + p["skip_b"][None, :, None, None]
        xin = skip + cv
    return xin


if __name__ == "__main__":
    # Lane-friendly small shapes: W a multiple of 128 keeps all in-kernel reshapes /
    # slices on vreg boundaries; H small keeps the test fast.
    N, Cin, Cout, H, W, F = 2, 8, 4, 8, 128, 2
    inner = max(16, Cout // 2)

    key = jax.random.PRNGKey(0)

    def nrm(k, shape, s=1.0):
        return jax.random.normal(k, shape, dtype=jnp.float32) * s

    keys = jax.random.split(key, 4)
    x = nrm(keys[0], (N, Cin, H, W))
    e = nrm(keys[1], (N, Cout, H * F, W * F), 0.5)

    uk = jax.random.split(keys[2], 6)
    upsample = {
        "gamma": 1.0 + nrm(uk[0], (Cin,), 0.1),
        "beta": nrm(uk[1], (Cin,), 0.1),
        "running_mean": nrm(uk[2], (Cin,), 0.1),
        "running_var": jnp.abs(nrm(uk[3], (Cin,))) * 0.2 + 0.8,
        "weight": nrm(uk[4], (Cin, Cout, F, F), 0.3),   # torch ConvTranspose2d layout
        "bias": nrm(uk[5], (Cout,), 0.1),
    }

    def make_block(k):
        bk = jax.random.split(k, 14)
        return {
            "bn1_gamma": 1.0 + nrm(bk[0], (Cout,), 0.1),
            "bn1_beta": nrm(bk[1], (Cout,), 0.1),
            "bn1_mean": nrm(bk[2], (Cout,), 0.1),
            "bn1_var": jnp.abs(nrm(bk[3], (Cout,))) * 0.2 + 0.8,
            "conv1_w": nrm(bk[4], (inner, Cout, 3, 3), 0.15),
            "conv1_b": nrm(bk[5], (inner,), 0.1),
            "bn2_gamma": 1.0 + nrm(bk[6], (inner,), 0.1),
            "bn2_beta": nrm(bk[7], (inner,), 0.1),
            "bn2_mean": nrm(bk[8], (inner,), 0.1),
            "bn2_var": jnp.abs(nrm(bk[9], (inner,))) * 0.2 + 0.8,
            "conv2_w": nrm(bk[10], (Cout, inner, 3, 3), 0.08),
            "conv2_b": nrm(bk[11], (Cout,), 0.1),
            "skip_w": nrm(bk[12], (Cout, Cout, 1, 1), 0.25),
            "skip_b": nrm(bk[13], (Cout,), 0.1),
        }

    blocks = [make_block(k) for k in jax.random.split(keys[3], 4)]
    params = {"upsample": upsample, "blocks": blocks}

    # max_tile_pixels=512 -> 2 row-blocks per image in kernel 1; rc_max_tile_rows=8 ->
    # 2 halo'd row-blocks per image in kernel 2 (exercises the tiled/halo paths).
    out = rdblock_forward(x, e, params, factor=F,
                          max_tile_pixels=512, rc_max_tile_rows=8)
    out = jax.block_until_ready(out)

    ref = _reference_rdblock(x, e, params, factor=F)
    assert out.shape == (N, Cout, H * F, W * F), out.shape
    max_err = float(jnp.max(jnp.abs(out - ref)))
    assert bool(jnp.allclose(out, ref, atol=1e-3, rtol=1e-3)), max_err

    print("KERNEL_OK")
</pallas_src>

<mosaic_0001>
module attributes {stable_mosaic.version = 11 : i64} {
  func.func @_upsample_add_kernel(%arg0: i32, %arg1: i32, %arg2: memref<1x8x512xf32, #tpu.memory_space<vmem>>, %arg3: memref<8x1xf32, #tpu.memory_space<vmem>>, %arg4: memref<8x1xf32, #tpu.memory_space<vmem>>, %arg5: memref<16x8xf32, #tpu.memory_space<vmem>>, %arg6: memref<2x128x256xbf16, #tpu.memory_space<vmem>>, %arg7: memref<4x1xf32, #tpu.memory_space<vmem>>, %arg8: memref<1x4x2048xf32, #tpu.memory_space<vmem>>, %arg9: memref<1x4x2048xf32, #tpu.memory_space<vmem>>) attributes {dimension_semantics = [#tpu.dimension_semantics<parallel>, #tpu.dimension_semantics<parallel>], iteration_bounds = array<i64: 2, 2>, scalar_prefetch = 0 : i64, scratch_operands = 0 : i64, tpu.core_type = #tpu.core_type<tc>, window_params = [{transform_indices = @transform_0, window_bounds = array<i64: 1, 8, 512>}, {pipeline_mode = #tpu.pipeline_mode<synchronous>, transform_indices = @transform_1, window_bounds = array<i64: 8, 1>}, {pipeline_mode = #tpu.pipeline_mode<synchronous>, transform_indices = @transform_2, window_bounds = array<i64: 8, 1>}, {pipeline_mode = #tpu.pipeline_mode<synchronous>, transform_indices = @transform_3, window_bounds = array<i64: 16, 8>}, {pipeline_mode = #tpu.pipeline_mode<synchronous>, transform_indices = @transform_4, window_bounds = array<i64: 2, 128, 256>}, {pipeline_mode = #tpu.pipeline_mode<synchronous>, transform_indices = @transform_5, window_bounds = array<i64: 4, 1>}, {transform_indices = @transform_6, window_bounds = array<i64: 1, 4, 2048>}, {transform_indices = @transform_7, window_bounds = array<i64: 1, 4, 2048>}]} {
    %c0 = arith.constant 0 : index
    %c0_0 = arith.constant 0 : index
    %c0_1 = arith.constant 0 : index
    %0 = vector.load %arg2[%c0, %c0_0, %c0_1] : memref<1x8x512xf32, #tpu.memory_space<vmem>>, vector<1x8x512xf32>
    %1 = vector.shape_cast %0 : vector<1x8x512xf32> to vector<8x512xf32>
    %c0_2 = arith.constant 0 : index
    %c0_3 = arith.constant 0 : index
    %2 = vector.load %arg3[%c0_2, %c0_3] : memref<8x1xf32, #tpu.memory_space<vmem>>, vector<8x1xf32>
    %3 = vector.broadcast %2 : vector<8x1xf32> to vector<8x512xf32>
    %4 = arith.mulf %1, %3 : vector<8x512xf32>
    %c0_4 = arith.constant 0 : index
    %c0_5 = arith.constant 0 : index
    %5 = vector.load %arg4[%c0_4, %c0_5] : memref<8x1xf32, #tpu.memory_space<vmem>>, vector<8x1xf32>
    %6 = vector.broadcast %5 : vector<8x1xf32> to vector<8x512xf32>
    %7 = arith.addf %4, %6 : vector<8x512xf32>
    %cst = arith.constant 0.000000e+00 : f32
    %8 = vector.broadcast %cst : f32 to vector<8x512xf32>
    %9 = arith.cmpf oge, %7, %8 : vector<8x512xf32>
    %cst_6 = arith.constant 0.00999999977 : f32
    %10 = vector.broadcast %cst_6 : f32 to vector<8x512xf32>
    %11 = arith.mulf %10, %7 : vector<8x512xf32>
    %12 = arith.select %9, %7, %11 : vector<8x512xi1>, vector<8x512xf32>
    %c0_7 = arith.constant 0 : index
    %c0_8 = arith.constant 0 : index
    %13 = vector.load %arg5[%c0_7, %c0_8] : memref<16x8xf32, #tpu.memory_space<vmem>>, vector<16x8xf32>
    %cst_9 = arith.constant dense<0.000000e+00> : vector<16x512xf32>
    %14 = tpu.matmul %13, %12, %cst_9 {dimension_numbers = #tpu.dot_dimension_numbers<[1], [0], [0], [1], [0, 0, 1, 1], [], []>, precision = #tpu.contract_precision<fp32>} : vector<16x8xf32>, vector<8x512xf32>, vector<16x512xf32> -> vector<16x512xf32>
    %15 = vector.extract_strided_slice %14 {offsets = [0, 0], sizes = [4, 512], strides = [1, 1]} : vector<16x512xf32> to vector<4x512xf32>
    %16 = vector.shape_cast %15 : vector<4x512xf32> to vector<16x128xf32>
    %17 = arith.truncf %16 : vector<16x128xf32> to vector<16x128xbf16>
    %18 = arith.extf %17 : vector<16x128xbf16> to vector<16x128xf32>
    %19 = arith.subf %16, %18 : vector<16x128xf32>
    %20 = arith.truncf %19 : vector<16x128xf32> to vector<16x128xbf16>
    %c0_10 = arith.constant 0 : index
    %c0_11 = arith.constant 0 : index
    %c0_12 = arith.constant 0 : index
    %21 = vector.load %arg6[%c0_10, %c0_11, %c0_12] : memref<2x128x256xbf16, #tpu.memory_space<vmem>>, vector<1x128x256xbf16>
    %22 = vector.shape_cast %21 : vector<1x128x256xbf16> to vector<128x256xbf16>
    %cst_13 = arith.constant dense<0.000000e+00> : vector<16x256xf32>
    %23 = tpu.matmul %17, %22, %cst_13 {dimension_numbers = #tpu.dot_dimension_numbers<[1], [0], [0], [1], [0, 0, 1, 1], [], []>} : vector<16x128xbf16>, vector<128x256xbf16>, vector<16x256xf32> -> vector<16x256xf32>
    %cst_14 = arith.constant dense<0.000000e+00> : vector<16x256xf32>
    %24 = tpu.matmul %20, %22, %cst_14 {dimension_numbers = #tpu.dot_dimension_numbers<[1], [0], [0], [1], [0, 0, 1, 1], [], []>} : vector<16x128xbf16>, vector<128x256xbf16>, vector<16x256xf32> -> vector<16x256xf32>
    %25 = arith.addf %23, %24 : vector<16x256xf32>
    %26 = vector.extract_strided_slice %14 {offsets = [4, 0], sizes = [4, 512], strides = [1, 1]} : vector<16x512xf32> to vector<4x512xf32>
    %27 = vector.shape_cast %26 : vector<4x512xf32> to vector<16x128xf32>
    %28 = arith.truncf %27 : vector<16x128xf32> to vector<16x128xbf16>
    %29 = arith.extf %28 : vector<16x128xbf16> to vector<16x128xf32>
    %30 = arith.subf %27, %29 : vector<16x128xf32>
    %31 = arith.truncf %30 : vector<16x128xf32> to vector<16x128xbf16>
    %c1 = arith.constant 1 : index
    %c0_15 = arith.constant 0 : index
    %c0_16 = arith.constant 0 : index
    %32 = vector.load %arg6[%c1, %c0_15, %c0_16] : memref<2x128x256xbf16, #tpu.memory_space<vmem>>, vector<1x128x256xbf16>
    %33 = vector.shape_cast %32 : vector<1x128x256xbf16> to vector<128x256xbf16>
    %cst_17 = arith.constant dense<0.000000e+00> : vector<16x256xf32>
    %34 = tpu.matmul %28, %33, %cst_17 {dimension_numbers = #tpu.dot_dimension_numbers<[1], [0], [0], [1], [0, 0, 1, 1], [], []>} : vector<16x128xbf16>, vector<128x256xbf16>, vector<16x256xf32> -> vector<16x256xf32>
    %cst_18 = arith.constant dense<0.000000e+00> : vector<16x256xf32>
    %35 = tpu.matmul %31, %33, %cst_18 {dimension_numbers = #tpu.dot_dimension_numbers<[1], [0], [0], [1], [0, 0, 1, 1], [], []>} : vector<16x128xbf16>, vector<128x256xbf16>, vector<16x256xf32> -> vector<16x256xf32>
    %36 = arith.addf %34, %35 : vector<16x256xf32>
    %37 = arith.addf %25, %36 : vector<16x256xf32>
    %38 = vector.extract_strided_slice %14 {offsets = [8, 0], sizes = [4, 512], strides = [1, 1]} : vector<16x512xf32> to vector<4x512xf32>
    %39 = vector.shape_cast %38 : vector<4x512xf32> to vector<16x128xf32>
    %40 = arith.truncf %39 : vector<16x128xf32> to vector<16x128xbf16>
    %41 = arith.extf %40 : vector<16x128xbf16> to vector<16x128xf32>
    %42 = arith.subf %39, %41 : vector<16x128xf32>
    %43 = arith.truncf %42 : vector<16x128xf32> to vector<16x128xbf16>
    %c0_19 = arith.constant 0 : index
    %c0_20 = arith.constant 0 : index
    %c0_21 = arith.constant 0 : index
    %44 = vector.load %arg6[%c0_19, %c0_20, %c0_21] : memref<2x128x256xbf16, #tpu.memory_space<vmem>>, vector<1x128x256xbf16>
    %45 = vector.shape_cast %44 : vector<1x128x256xbf16> to vector<128x256xbf16>
    %cst_22 = arith.constant dense<0.000000e+00> : vector<16x256xf32>
    %46 = tpu.matmul %40, %45, %cst_22 {dimension_numbers = #tpu.dot_dimension_numbers<[1], [0], [0], [1], [0, 0, 1, 1], [], []>} : vector<16x128xbf16>, vector<128x256xbf16>, vector<16x256xf32> -> vector<16x256xf32>
    %cst_23 = arith.constant dense<0.000000e+00> : vector<16x256xf32>
    %47 = tpu.matmul %43, %45, %cst_23 {dimension_numbers = #tpu.dot_dimension_numbers<[1], [0], [0], [1], [0, 0, 1, 1], [], []>} : vector<16x128xbf16>, vector<128x256xbf16>, vector<16x256xf32> -> vector<16x256xf32>
    %48 = arith.addf %46, %47 : vector<16x256xf32>
    %49 = vector.extract_strided_slice %14 {offsets = [12, 0], sizes = [4, 512], strides = [1, 1]} : vector<16x512xf32> to vector<4x512xf32>
    %50 = vector.shape_cast %49 : vector<4x512xf32> to vector<16x128xf32>
    %51 = arith.truncf %50 : vector<16x128xf32> to vector<16x128xbf16>
    %52 = arith.extf %51 : vector<16x128xbf16> to vector<16x128xf32>
    %53 = arith.subf %50, %52 : vector<16x128xf32>
    %54 = arith.truncf %53 : vector<16x128xf32> to vector<16x128xbf16>
    %c1_24 = arith.constant 1 : index
    %c0_25 = arith.constant 0 : index
    %c0_26 = arith.constant 0 : index
    %55 = vector.load %arg6[%c1_24, %c0_25, %c0_26] : memref<2x128x256xbf16, #tpu.memory_space<vmem>>, vector<1x128x256xbf16>
    %56 = vector.shape_cast %55 : vector<1x128x256xbf16> to vector<128x256xbf16>
    %cst_27 = arith.constant dense<0.000000e+00> : vector<16x256xf32>
    %57 = tpu.matmul %51, %56, %cst_27 {dimension_numbers = #tpu.dot_dimension_numbers<[1], [0], [0], [1], [0, 0, 1, 1], [], []>} : vector<16x128xbf16>, vector<128x256xbf16>, vector<16x256xf32> -> vector<16x256xf32>
    %cst_28 = arith.constant dense<0.000000e+00> : vector<16x256xf32>
    %58 = tpu.matmul %54, %56, %cst_28 {dimension_numbers = #tpu.dot_dimension_numbers<[1], [0], [0], [1], [0, 0, 1, 1], [], []>} : vector<16x128xbf16>, vector<128x256xbf16>, vector<16x256xf32> -> vector<16x256xf32>
    %59 = arith.addf %57, %58 : vector<16x256xf32>
    %60 = arith.addf %48, %59 : vector<16x256xf32>
    %61 = tpu.concatenate %37, %60 in 1 : vector<16x256xf32>, vector<16x256xf32> -> vector<16x512xf32>
    %62 = vector.shape_cast %61 : vector<16x512xf32> to vector<4x2048xf32>
    %c0_29 = arith.constant 0 : index
    %c0_30 = arith.constant 0 : index
    %63 = vector.load %arg7[%c0_29, %c0_30] : memref<4x1xf32, #tpu.memory_space<vmem>>, vector<4x1xf32>
    %64 = vector.broadcast %63 : vector<4x1xf32> to vector<4x2048xf32>
    %65 = arith.addf %62, %64 : vector<4x2048xf32>
    %c0_31 = arith.constant 0 : index
    %c0_32 = arith.constant 0 : index
    %c0_33 = arith.constant 0 : index
    %66 = vector.load %arg8[%c0_31, %c0_32, %c0_33] : memref<1x4x2048xf32, #tpu.memory_space<vmem>>, vector<1x4x2048xf32>
    %67 = vector.shape_cast %66 : vector<1x4x2048xf32> to vector<4x2048xf32>
    %68 = arith.addf %65, %67 : vector<4x2048xf32>
    %c0_34 = arith.constant 0 : index
    %c0_35 = arith.constant 0 : index
    %c0_36 = arith.constant 0 : index
    %69 = vector.load %arg9[%c0_34, %c0_35, %c0_36] : memref<1x4x2048xf32, #tpu.memory_space<vmem>>, vector<1x4x2048xf32>
    %70 = vector.shape_cast %69 : vector<1x4x2048xf32> to vector<4x2048xf32>
    %71 = vector.shape_cast %68 : vector<4x2048xf32> to vector<1x4x2048xf32>
    tpu.vector_store %arg9[%c0_34, %c0_35, %c0_36], %71 {strides = array<i32>} : memref<1x4x2048xf32, #tpu.memory_space<vmem>>, vector<1x4x2048xf32>,
    return
  }
  func.func @transform_0(%arg0: i32, %arg1: i32) -> (i32, i32, i32) {
    %c0_i32 = arith.constant 0 : i32
    %c0_i32_0 = arith.constant 0 : i32
    return %arg0, %c0_i32, %arg1 : i32, i32, i32
  }
  func.func @transform_1(%arg0: i32, %arg1: i32) -> (i32, i32) {
    %c0_i32 = arith.constant 0 : i32
    %c0_i32_0 = arith.constant 0 : i32
    %c0_i32_1 = arith.constant 0 : i32
    return %c0_i32, %c0_i32_0 : i32, i32
  }
  func.func @transform_2(%arg0: i32, %arg1: i32) -> (i32, i32) {
    %c0_i32 = arith.constant 0 : i32
    %c0_i32_0 = arith.constant 0 : i32
    %c0_i32_1 = arith.constant 0 : i32
    return %c0_i32, %c0_i32_0 : i32, i32
  }
  func.func @transform_3(%arg0: i32, %arg1: i32) -> (i32, i32) {
    %c0_i32 = arith.constant 0 : i32
    %c0_i32_0 = arith.constant 0 : i32
    %c0_i32_1 = arith.constant 0 : i32
    return %c0_i32, %c0_i32_0 : i32, i32
  }
  func.func @transform_4(%arg0: i32, %arg1: i32) -> (i32, i32, i32) {
    %c0_i32 = arith.constant 0 : i32
    %c0_i32_0 = arith.constant 0 : i32
    %c0_i32_1 = arith.constant 0 : i32
    %c0_i32_2 = arith.constant 0 : i32
    return %c0_i32, %c0_i32_0, %c0_i32_1 : i32, i32, i32
  }
  func.func @transform_5(%arg0: i32, %arg1: i32) -> (i32, i32) {
    %c0_i32 = arith.constant 0 : i32
    %c0_i32_0 = arith.constant 0 : i32
    %c0_i32_1 = arith.constant 0 : i32
    return %c0_i32, %c0_i32_0 : i32, i32
  }
  func.func @transform_6(%arg0: i32, %arg1: i32) -> (i32, i32, i32) {
    %c0_i32 = arith.constant 0 : i32
    %c0_i32_0 = arith.constant 0 : i32
    return %arg0, %c0_i32, %arg1 : i32, i32, i32
  }
  func.func @transform_7(%arg0: i32, %arg1: i32) -> (i32, i32, i32) {
    %c0_i32 = arith.constant 0 : i32
    %c0_i32_0 = arith.constant 0 : i32
    return %arg0, %c0_i32, %arg1 : i32, i32, i32
  }
}

</mosaic_0001>

<llo_original>
// kernel: tpu_custom_call.1
$region0: #{tpu_custom_call.1}
  #allocation0 [shape = 'u32[]', space=smem, size = 0x4, offset = 0x4, fixed_abs, tag = 'smem constant byte address 0x4 - core index']
  #allocation1 [shape = 'u32[144,128]{1,0:T(1,128)}', space=vmem, size = 0x12000, scoped, tag = 'internal scratch']
  %s0 = inlined_call_operand.hbm [shape: f32[2,8,1024], index: 0, kind: input, shape index: {}]
  %s1 = inlined_call_operand.vmem [shape: f32[8,1], index: 1, kind: input, shape index: {}]
  %s2 = inlined_call_operand.vmem [shape: f32[8,1], index: 2, kind: input, shape index: {}]
  %s3 = inlined_call_operand.vmem [shape: f32[16,8], index: 3, kind: input, shape index: {}]
  %s4 = inlined_call_operand.hbm [shape: bf16[2,128,256], index: 4, kind: input, shape index: {}]
  %s5 = inlined_call_operand.vmem [shape: f32[4,1], index: 5, kind: input, shape index: {}]
  %s6 = inlined_call_operand.hbm [shape: f32[2,4,4096], index: 6, kind: input, shape index: {}]
  %s7 = inlined_call_operand.hbm [shape: f32[2,4,4096], index: 7, kind: output, shape index: {}]
  %s8 = sld [smem:[#allocation0]]
  $region73: #{tpu_custom_call.1} parent=0
    _
  %s10 = ssub.s32 1, %s8
  %s11 = scalar_select 0, %s10, %s8
  $region1: #{tpu_custom_call.1} parent=0
    #allocation2 [shape = 'u8[32768]{0}', space=vmem, size = 0x8000, scoped, tag = 'input window, operand 0']
    #allocation3 [shape = 's32[2]{0}', space=sflag, size = 0x8, scoped, tag = 'scoped memory for tpu_custom_call.1']
    #allocation4 [shape = 's32[2]{0}', space=sflag, size = 0x8, scoped, tag = 'scoped memory for tpu_custom_call.1']
    #allocation5 [shape = 'u8[131072]{0}', space=vmem, size = 0x20000, scoped, tag = 'input window, operand 4, single buffered']
    #allocation6 [shape = 's32[1]{0}', space=sflag, size = 0x4, scoped, tag = 'scoped memory for tpu_custom_call.1']
    #allocation7 [shape = 'u8[65536]{0}', space=vmem, size = 0x10000, scoped, tag = 'input window, operand 6']
    #allocation8 [shape = 'u8[65536]{0}', space=vmem, size = 0x10000, scoped, tag = 'output window, operand 0']
    %12 = vsyncpa [#allocation3], 0
    %s13 = scalar_lea.sflag [#allocation3], 1
    %14 = vsyncpa %s13, 0
    %15 = vsyncpa [#allocation6], 0
    %16 = vsyncpa [#allocation4], 0
    %s17 = scalar_lea.sflag [#allocation4], 1
    %18 = vsyncpa %s17, 0
    loop: start=0, step=1, limit=6
    $region2: #{tpu_custom_call.1} parent=1 // loop_pre_header
      _
    $region3: #{tpu_custom_call.1} parent=1 // loop_header
      %s20 = sphi 0, %s24
      %p21 = scmp.ge.s32.totalorder %s20, 6
      %s27 = sphi 0, %s39
      %s28 = sphi 0, %s35
      %s29 = sphi 0, %s27
      %s30 = sphi 0, %s28
      %s31 = sphi 0, %s29
      %s32 = sphi 0, %s30
      %s44 = sphi 0, %s46
      %s47 = sphi 0, %s44
      %s48 = sphi 0, %s47
      %s64 = sphi 0, %s48
      %s68 = sphi 0, %s68
      %s70 = sphi 0, %s68
      %s71 = sphi 0, %s70
      %s85 = sphi 0, %s71
      %s89 = sphi 0, %s89
      %s91 = sphi 0, %s89
      %s92 = sphi 0, %s91
      %s106 = sphi 0, %s92
      %s110 = sphi 0, %s110
      %s112 = sphi 0, %s110
      %s113 = sphi 0, %s112
      %s127 = sphi 0, %s113
      %s131 = sphi 0, %s131
      %s133 = sphi 0, %s131
      %s134 = sphi 0, %s133
      %s148 = sphi 0, %s134
      %s152 = sphi 0, %s152
      %s154 = sphi 0, %s152
      %s155 = sphi 0, %s154
      %s169 = sphi 0, %s155
      %s177 = sphi 0, %s179
      %s180 = sphi 0, %s177
      %s181 = sphi 0, %s180
      %s197 = sphi 0, %s181
      %s205 = sphi 0, %s207
      %s208 = sphi 0, %s205
      %s209 = sphi 0, %s208
      %s225 = sphi 0, %s209
    $region4: #{tpu_custom_call.1} parent=1 // loop_header_branch
      %23 = sbr.rel (%p21) target = $region8
    $region5: #{tpu_custom_call.1} parent=1 // loop_body
      %s25 = ssub.s32 %s20, 1
      %s26 = ssub.s32 %s20, 2
      %s33 = sadd.s32 1, %s28
      %p34 = scmp.ge.s32.totalorder %s33, 2
      %s35 = scalar_select %p34, 0, %s33
      %s36 = sadd.s32 1, %s27
      %s37 = scalar_select %p34, %s36, %s27
      %p38 = scmp.ge.s32.totalorder %s37, 2
      %s39 = scalar_select %p38, 0, %s37
      %s40 = ssub.s32 %s27, %s39
      %s41 = ssub.s32 %s28, %s35
      %s42 = sor.u32 %s40, %s41
      %p43 = scmp.eq.s32.totalorder %s42, 0
      %s45 = sadd.s32 %s44, 1
      %s46 = scalar_select %p43, %s44, %s45
      %p49 = pneg %p43
      %p50 = scmp.eq.s32.totalorder %s20, 3
      %p51 = por %p49, %p50
      %p52 = scmp.ne.s32.totalorder %s44, %s47
      %p53 = scmp.eq.s32.totalorder %s20, 0
      %p54 = por %p52, %p53
      %p55 = scmp.ne.s32.totalorder %s44, %s47
      %p56 = scmp.eq.s32.totalorder %s25, 3
      %p57 = por %p55, %p56
      %p58 = scmp.ne.s32.totalorder %s47, %s48
      %p59 = scmp.eq.s32.totalorder %s25, 0
      %p60 = por %p58, %p59
      %p61 = scmp.ne.s32.totalorder %s47, %s48
      %p62 = scmp.eq.s32.totalorder %s26, 3
      %p63 = por %p61, %p62
      %p65 = scmp.ne.s32.totalorder %s48, %s64
      %p66 = scmp.eq.s32.totalorder %s26, 0
      %p67 = por %p65, %p66
      %s69 = sadd.s32 %s68, 1
      %p72 = scmp.eq.s32.totalorder %s20, 3
      %p73 = scmp.ne.s32.totalorder %s68, %s70
      %p74 = scmp.eq.s32.totalorder %s20, 0
      %p75 = por %p73, %p74
      %p76 = scmp.ne.s32.totalorder %s68, %s70
      %p77 = scmp.eq.s32.totalorder %s25, 3
      %p78 = por %p76, %p77
      %p79 = scmp.ne.s32.totalorder %s70, %s71
      %p80 = scmp.eq.s32.totalorder %s25, 0
      %p81 = por %p79, %p80
      %p82 = scmp.ne.s32.totalorder %s70, %s71
      %p83 = scmp.eq.s32.totalorder %s26, 3
      %p84 = por %p82, %p83
      %p86 = scmp.ne.s32.totalorder %s71, %s85
      %p87 = scmp.eq.s32.totalorder %s26, 0
      %p88 = por %p86, %p87
      %s90 = sadd.s32 %s89, 1
      %p93 = scmp.eq.s32.totalorder %s20, 3
      %p94 = scmp.ne.s32.totalorder %s89, %s91
      %p95 = scmp.eq.s32.totalorder %s20, 0
      %p96 = por %p94, %p95
      %p97 = scmp.ne.s32.totalorder %s89, %s91
      %p98 = scmp.eq.s32.totalorder %s25, 3
      %p99 = por %p97, %p98
      %p100 = scmp.ne.s32.totalorder %s91, %s92
      %p101 = scmp.eq.s32.totalorder %s25, 0
      %p102 = por %p100, %p101
      %p103 = scmp.ne.s32.totalorder %s91, %s92
      %p104 = scmp.eq.s32.totalorder %s26, 3
      %p105 = por %p103, %p104
      %p107 = scmp.ne.s32.totalorder %s92, %s106
      %p108 = scmp.eq.s32.totalorder %s26, 0
      %p109 = por %p107, %p108
      %s111 = sadd.s32 %s110, 1
      %p114 = scmp.eq.s32.totalorder %s20, 3
      %p115 = scmp.ne.s32.totalorder %s110, %s112
      %p116 = scmp.eq.s32.totalorder %s20, 0
      %p117 = por %p115, %p116
      %p118 = scmp.ne.s32.totalorder %s110, %s112
      %p119 = scmp.eq.s32.totalorder %s25, 3
      %p120 = por %p118, %p119
      %p121 = scmp.ne.s32.totalorder %s112, %s113
      %p122 = scmp.eq.s32.totalorder %s25, 0
      %p123 = por %p121, %p122
      %p124 = scmp.ne.s32.totalorder %s112, %s113
      %p125 = scmp.eq.s32.totalorder %s26, 3
      %p126 = por %p124, %p125
      %p128 = scmp.ne.s32.totalorder %s113, %s127
      %p129 = scmp.eq.s32.totalorder %s26, 0
      %p130 = por %p128, %p129
      %s132 = sadd.s32 %s131, 1
      %p135 = scmp.eq.s32.totalorder %s20, 3
      %p136 = scmp.ne.s32.totalorder %s131, %s133
      %p137 = scmp.eq.s32.totalorder %s20, 0
      %p138 = por %p136, %p137
      %p139 = scmp.ne.s32.totalorder %s131, %s133
      %p140 = scmp.eq.s32.totalorder %s25, 3
      %p141 = por %p139, %p140
      %p142 = scmp.ne.s32.totalorder %s133, %s134
      %p143 = scmp.eq.s32.totalorder %s25, 0
      %p144 = por %p142, %p143
      %p145 = scmp.ne.s32.totalorder %s133, %s134
      %p146 = scmp.eq.s32.totalorder %s26, 3
      %p147 = por %p145, %p146
      %p149 = scmp.ne.s32.totalorder %s134, %s148
      %p150 = scmp.eq.s32.totalorder %s26, 0
      %p151 = por %p149, %p150
      %s153 = sadd.s32 %s152, 1
      %p156 = scmp.eq.s32.totalorder %s20, 3
      %p157 = scmp.ne.s32.totalorder %s152, %s154
      %p158 = scmp.eq.s32.totalorder %s20, 0
      %p159 = por %p157, %p158
      %p160 = scmp.ne.s32.totalorder %s152, %s154
      %p161 = scmp.eq.s32.totalorder %s25, 3
      %p162 = por %p160, %p161
      %p163 = scmp.ne.s32.totalorder %s154, %s155
      %p164 = scmp.eq.s32.totalorder %s25, 0
      %p165 = por %p163, %p164
      %p166 = scmp.ne.s32.totalorder %s154, %s155
      %p167 = scmp.eq.s32.totalorder %s26, 3
      %p168 = por %p166, %p167
      %p170 = scmp.ne.s32.totalorder %s155, %s169
      %p171 = scmp.eq.s32.totalorder %s26, 0
      %p172 = por %p170, %p171
      %s173 = ssub.s32 %s27, %s39
      %s174 = ssub.s32 %s28, %s35
      %s175 = sor.u32 %s173, %s174
      %p176 = scmp.eq.s32.totalorder %s175, 0
      %s178 = sadd.s32 %s177, 1
      %s179 = scalar_select %p176, %s177, %s178
      %p182 = pneg %p176
      %p183 = scmp.eq.s32.totalorder %s20, 3
      %p184 = por %p182, %p183
      %p185 = scmp.ne.s32.totalorder %s177, %s180
      %p186 = scmp.eq.s32.totalorder %s20, 0
      %p187 = por %p185, %p186
      %p188 = scmp.ne.s32.totalorder %s177, %s180
      %p189 = scmp.eq.s32.totalorder %s25, 3
      %p190 = por %p188, %p189
      %p191 = scmp.ne.s32.totalorder %s180, %s181
      %p192 = scmp.eq.s32.totalorder %s25, 0
      %p193 = por %p191, %p192
      %p194 = scmp.ne.s32.totalorder %s180, %s181
      %p195 = scmp.eq.s32.totalorder %s26, 3
      %p196 = por %p194, %p195
      %p198 = scmp.ne.s32.totalorder %s181, %s197
      %p199 = scmp.eq.s32.totalorder %s26, 0
      %p200 = por %p198, %p199
      %s201 = ssub.s32 %s27, %s39
      %s202 = ssub.s32 %s28, %s35
      %s203 = sor.u32 %s201, %s202
      %p204 = scmp.eq.s32.totalorder %s203, 0
      %s206 = sadd.s32 %s205, 1
      %s207 = scalar_select %p204, %s205, %s206
      %p210 = pneg %p204
      %p211 = scmp.eq.s32.totalorder %s20, 3
      %p212 = por %p210, %p211
      %p213 = scmp.ne.s32.totalorder %s205, %s208
      %p214 = scmp.eq.s32.totalorder %s20, 0
      %p215 = por %p213, %p214
      %p216 = scmp.ne.s32.totalorder %s205, %s208
      %p217 = scmp.eq.s32.totalorder %s25, 3
      %p218 = por %p216, %p217
      %p219 = scmp.ne.s32.totalorder %s208, %s209
      %p220 = scmp.eq.s32.totalorder %s25, 0
      %p221 = por %p219, %p220
      %p222 = scmp.ne.s32.totalorder %s208, %s209
      %p223 = scmp.eq.s32.totalorder %s26, 3
      %p224 = por %p222, %p223
      %p226 = scmp.ne.s32.totalorder %s209, %s225
      %p227 = scmp.eq.s32.totalorder %s26, 0
      %p228 = por %p226, %p227
      %p229 = scmp.le.s32.totalorder 1, %s20
      %p230 = scmp.lt.s32.totalorder %s20, 5
      %p231 = pnand %p229, %p230
      %p232 = pneg %p231
      // Predicated region
      $region9: #{tpu_custom_call.1} parent=5 // pred_check
        _
      $region10: #{tpu_custom_call.1} parent=5 // pred_check_branch
        %234 = sbr.rel (%p231) target = $region12
      $region11: #{tpu_custom_call.1} parent=5 // pred_region
        %s235 = ssub.s32 %s20, 1
        // Predicated region
        $region13: #{tpu_custom_call.1} parent=11 // pred_check
          %p236 = pneg %p81
        $region14: #{tpu_custom_call.1} parent=11 // pred_check_branch
          %238 = sbr.rel (%p236) target = $region16
        $region15: #{tpu_custom_call.1} parent=11 // pred_region
          _
        $region16: #{tpu_custom_call.1} parent=11 // pred_fallthru
          _
        // Predicated region
        $region17: #{tpu_custom_call.1} parent=11 // pred_check
          %p239 = pneg %p102
        $region18: #{tpu_custom_call.1} parent=11 // pred_check_branch
          %241 = sbr.rel (%p239) target = $region20
        $region19: #{tpu_custom_call.1} parent=11 // pred_region
          _
        $region20: #{tpu_custom_call.1} parent=11 // pred_fallthru
          _
        // Predicated region
        $region21: #{tpu_custom_call.1} parent=11 // pred_check
          %p242 = pneg %p123
        $region22: #{tpu_custom_call.1} parent=11 // pred_check_branch
          %244 = sbr.rel (%p242) target = $region24
        $region23: #{tpu_custom_call.1} parent=11 // pred_region
          _
        $region24: #{tpu_custom_call.1} parent=11 // pred_fallthru
          _
        // Predicated region
        $region25: #{tpu_custom_call.1} parent=11 // pred_check
          %p245 = pneg %p144
        $region26: #{tpu_custom_call.1} parent=11 // pred_check_branch
          %247 = sbr.rel (%p245) target = $region28
        $region27: #{tpu_custom_call.1} parent=11 // pred_region
          %s249 = ssub.s32 4096, 4096
          %250 = vsyncadd [#allocation6], %s249
          %s251 = sshll.u32 [#allocation5], 4
          %s252 = int_to_ptr.vmem [resolvable:$true] %s251
          %257 = dma.hbm_to_vmem [thread:$0]  %s4, 4096, %s252, [#allocation6], 128, 128, 8
        $region28: #{tpu_custom_call.1} parent=11 // pred_fallthru
          _
        // Predicated region
        $region29: #{tpu_custom_call.1} parent=11 // pred_check
          %p258 = pneg %p165
        $region30: #{tpu_custom_call.1} parent=11 // pred_check_branch
          %260 = sbr.rel (%p258) target = $region32
        $region31: #{tpu_custom_call.1} parent=11 // pred_region
          _
        $region32: #{tpu_custom_call.1} parent=11 // pred_fallthru
          _
      $region12: #{tpu_custom_call.1} parent=5 // pred_fallthru
        _
      %p261 = scmp.lt.s32.totalorder %s20, 4
      // Predicated region
      $region33: #{tpu_custom_call.1} parent=5 // pred_check
        %p262 = pneg %p261
      $region34: #{tpu_custom_call.1} parent=5 // pred_check_branch
        %264 = sbr.rel (%p262) target = $region36
      $region35: #{tpu_custom_call.1} parent=5 // pred_region
        // Predicated region
        $region37: #{tpu_custom_call.1} parent=35 // pred_check
          %p265 = pneg %p54
        $region38: #{tpu_custom_call.1} parent=35 // pred_check_branch
          %267 = sbr.rel (%p265) target = $region40
        $region39: #{tpu_custom_call.1} parent=35 // pred_region
          %s268 = sand.u32 %s20, 1
          %s269 = scalar_lea.sflag [#allocation3], %s268
          %s270 = sand.u32 %s44, 1
          %s271 = smul.addr %s270, 32
          %s272 = scalar_lea.vmem [#allocation2], %s271
          %s273 = smul.u32 4, %s28
          %s275 = ssub.s32 512, 512
          %276 = vsyncadd %s269, %s275
          %s277 = smul.addr %s27, 8
          %s278 = sadd.s32 %s273, %s277
          %s279 = smul.addr %s278, 128
          %s280 = scalar_lea.hbm %s0, %s279
          %s282 = sshll.u32 %s272, 4
          %s283 = int_to_ptr.vmem [resolvable:$true] %s282
          %285 = dma.hbm_to_vmem [thread:$0]  %s280, 512, %s283, %s269
        $region40: #{tpu_custom_call.1} parent=35 // pred_fallthru
          _
        // Predicated region
        $region41: #{tpu_custom_call.1} parent=35 // pred_check
          %p286 = pneg %p187
        $region42: #{tpu_custom_call.1} parent=35 // pred_check_branch
          %288 = sbr.rel (%p286) target = $region44
        $region43: #{tpu_custom_call.1} parent=35 // pred_region
          %s289 = sand.u32 %s20, 1
          %s290 = scalar_lea.sflag [#allocation3], %s289
          %s291 = sand.u32 %s177, 1
          %s292 = smul.addr %s291, 64
          %s293 = scalar_lea.vmem [#allocation7], %s292
          %s294 = smul.u32 16, %s28
          %s296 = ssub.s32 1024, 1024
          %297 = vsyncadd %s290, %s296
          %s298 = smul.addr %s27, 32
          %s299 = sadd.s32 %s294, %s298
          %s300 = smul.addr %s299, 64
          %s301 = scalar_lea.hbm %s6, %s300
          %s303 = sshll.u32 %s293, 4
          %s304 = int_to_ptr.vmem [resolvable:$true] %s303
          %306 = dma.hbm_to_vmem [thread:$0]  %s301, 1024, %s304, %s290
        $region44: #{tpu_custom_call.1} parent=35 // pred_fallthru
          _
      $region36: #{tpu_custom_call.1} parent=5 // pred_fallthru
        _
      %p307 = scmp.le.s32.totalorder 1, %s20
      %p308 = scmp.lt.s32.totalorder %s20, 5
      %p309 = pnand %p307, %p308
      %p310 = pneg %p309
      // Predicated region
      $region45: #{tpu_custom_call.1} parent=5 // pred_check
        _
      $region46: #{tpu_custom_call.1} parent=5 // pred_check_branch
        %312 = sbr.rel (%p309) target = $region48
      $region47: #{tpu_custom_call.1} parent=5 // pred_region
        %s313 = ssub.s32 %s20, 1
        %s314 = sand.u32 %s25, 1
        %s315 = scalar_lea.sflag [#allocation3], %s314
        %s316 = sand.u32 %s47, 1
        %s317 = smul.addr %s316, 32
        %s318 = scalar_lea.vmem [#allocation2], %s317
        // Predicated region
        $region49: #{tpu_custom_call.1} parent=47 // pred_check
          %p319 = pneg %p60
        $region50: #{tpu_custom_call.1} parent=47 // pred_check_branch
          %321 = sbr.rel (%p319) target = $region52
        $region51: #{tpu_custom_call.1} parent=47 // pred_region
          %322 = dma.done %s315, 512
        $region52: #{tpu_custom_call.1} parent=47 // pred_fallthru
          _
        // Predicated region
        $region53: #{tpu_custom_call.1} parent=47 // pred_check
          %p323 = pneg %p144
        $region54: #{tpu_custom_call.1} parent=47 // pred_check_branch
          %325 = sbr.rel (%p323) target = $region56
        $region55: #{tpu_custom_call.1} parent=47 // pred_region
          %326 = dma.done [#allocation6], 4096
        $region56: #{tpu_custom_call.1} parent=47 // pred_fallthru
          _
        %s327 = sand.u32 %s25, 1
        %s328 = scalar_lea.sflag [#allocation3], %s327
        %s329 = sand.u32 %s180, 1
        %s330 = smul.addr %s329, 64
        %s331 = scalar_lea.vmem [#allocation7], %s330
        // Predicated region
        $region57: #{tpu_custom_call.1} parent=47 // pred_check
          %p332 = pneg %p193
        $region58: #{tpu_custom_call.1} parent=47 // pred_check_branch
          %334 = sbr.rel (%p332) target = $region60
        $region59: #{tpu_custom_call.1} parent=47 // pred_region
          %335 = dma.done %s328, 1024
        $region60: #{tpu_custom_call.1} parent=47 // pred_fallthru
          _
        %s336 = sand.u32 %s25, 1
        %s337 = scalar_lea.sflag [#allocation3], %s336
        %s338 = sand.u32 %s47, 1
        %s339 = smul.addr %s338, 32
        %s340 = scalar_lea.vmem [#allocation2], %s339
        %p341 = pneg %p60
        %p342 = pneg %p57
        %p343 = pneg %p81
        %p344 = pneg %p78
        %p345 = pneg %p102
        %p346 = pneg %p99
        %p347 = pneg %p123
        %p348 = pneg %p120
        %p349 = pneg %p144
        %p350 = pneg %p141
        %p351 = pneg %p165
        %p352 = pneg %p162
        %s353 = sand.u32 %s25, 1
        %s354 = scalar_lea.sflag [#allocation3], %s353
        %s355 = sand.u32 %s180, 1
        %s356 = smul.addr %s355, 64
        %s357 = scalar_lea.vmem [#allocation7], %s356
        %p358 = pneg %p193
        %p359 = pneg %p190
        %p360 = pneg %p221
        %p361 = pneg %p218
        %s362 = sand.u32 %s208, 1
        %s363 = scalar_lea.sflag [#allocation4], %s362
        %s364 = sand.u32 %s208, 1
        %s365 = smul.addr %s364, 64
        %s366 = scalar_lea.vmem [#allocation8], %s365
        %s367 = smul.u32 4, %s30
        %s368 = smul.u32 16, %s30
        %s369 = smul.u32 16, %s30
        %v371 = vld [vmem:[%s318] sm:$0xff]
        %v372 = vld [vmem:[%s318 + $0x8] sm:$0xff]
        %v373 = vld [vmem:[%s318 + $0x10] sm:$0xff]
        %v374 = vld [vmem:[%s318 + $0x18] sm:$0xff]
        %v375 = vld [vmem:[%s1] sm:$0xff]
        %377 = vset.pattern.permute.xlu0 0
        %378 = vperm.xlu0 %377, %v375
        %v379 = vpop.permute.xlu0 %378
        %v381 = vmul.f32 %v371, %v379
        %v382 = vmul.f32 %v372, %v379
        %v383 = vmul.f32 %v373, %v379
        %v384 = vmul.f32 %v374, %v379
        %v385 = vld [vmem:[%s2] sm:$0xff]
        %387 = vset.pattern.permute.xlu0 0
        %388 = vperm.xlu0 %387, %v385
        %v389 = vpop.permute.xlu0 %388
        %v391 = vadd.f32 %v381, %v389
        %v392 = vadd.f32 %v382, %v389
        %v393 = vadd.f32 %v383, %v389
        %v394 = vadd.f32 %v384, %v389
        %vm395 = vcmp.ge.f32.partialorder %v391, 0.0
        %vm396 = vcmp.ge.f32.partialorder %v392, 0.0
        %vm397 = vcmp.ge.f32.partialorder %v393, 0.0
        %vm398 = vcmp.ge.f32.partialorder %v394, 0.0
        %v399 = vmul.f32 %v391, 0.01
        %v400 = vmul.f32 %v392, 0.01
        %v401 = vmul.f32 %v393, 0.01
        %v402 = vmul.f32 %v394, 0.01
        %v403 = vsel %vm395, %v391, %v399
        %v404 = vsel %vm396, %v392, %v400
        %v405 = vsel %vm397, %v393, %v401
        %v406 = vsel %vm398, %v394, %v402
        %v407 = vld [vmem:[%s3] sm:$0xff]
        %v408 = vld [vmem:[%s3 + $0x8] sm:$0xff]
        %vm409 = vcmask 64512
        %v411 = vsel %vm409, %v407, 0
        %v414 = vsel %vm409, %v408, 0
        %v416 = vand.u32 %v404, 4294901760
        %417 = vmatprep.subr.mxu0 %v416
        %v418 = vand.u32 %v403, 4294901760
        %419 = vmatpush1.msra.mxu0 %v418
        %420 = vmatprep.subr.mxu0 0.0
        %421 = vmatpush1.msra.mxu0 0.0
        %422 = vmatprep.subr.mxu0 0.0
        %423 = vmatpush1.msra.mxu0 0.0
        %424 = vmatprep.subr.mxu0 0.0
        %425 = vmatpush1.msra.mxu0 0.0
        %426 = vmatprep.subr.mxu0 0.0
        %427 = vmatpush1.msra.mxu0 0.0
        %428 = vmatprep.subr.mxu0 0.0
        %429 = vmatpush1.msra.mxu0 0.0
        %430 = vmatprep.subr.mxu0 0.0
        %431 = vmatpush1.msra.mxu0 0.0
        %432 = vmatprep.subr.mxu0 0.0
        %433 = vmatpush1.msra.mxu0 0.0
        %434 = vmatprep.subr.mxu0 0.0
        %435 = vmatpush1.msra.mxu0 0.0
        %436 = vmatprep.subr.mxu0 0.0
        %437 = vmatpush1.msra.mxu0 0.0
        %438 = vmatprep.subr.mxu0 0.0
        %439 = vmatpush1.msra.mxu0 0.0
        %440 = vmatprep.subr.mxu0 0.0
        %441 = vmatpush1.msra.mxu0 0.0
        %442 = vmatprep.subr.mxu0 0.0
        %443 = vmatpush1.msra.mxu0 0.0
        %444 = vmatprep.subr.mxu0 0.0
        %445 = vmatpush1.msra.mxu0 0.0
        %446 = vmatprep.subr.mxu0 0.0
        %447 = vmatpush1.msra.mxu0 0.0
        %448 = vmatprep.subr.mxu0 0.0
        %449 = vmatpush1.msra.mxu0 0.0
        %450 = vmatprep.subr.mxu0 0.0
        %451 = vmatpush1.msra.mxu0 0.0
        %452 = vmatprep.subr.mxu0 0.0
        %453 = vmatpush1.msra.mxu0 0.0
        %454 = vmatprep.subr.mxu0 0.0
        %455 = vmatpush1.msra.mxu0 0.0
        %456 = vmatprep.subr.mxu0 0.0
        %457 = vmatpush1.msra.mxu0 0.0
        %458 = vmatprep.subr.mxu0 0.0
        %459 = vmatpush1.msra.mxu0 0.0
        %460 = vmatprep.subr.mxu0 0.0
        %461 = vmatpush1.msra.mxu0 0.0
        %462 = vmatprep.subr.mxu0 0.0
        %463 = vmatpush1.msra.mxu0 0.0
        %464 = vmatprep.subr.mxu0 0.0
        %465 = vmatpush1.msra.mxu0 0.0
        %466 = vmatprep.subr.mxu0 0.0
        %467 = vmatpush1.msra.mxu0 0.0
        %468 = vmatprep.subr.mxu0 0.0
        %469 = vmatpush1.msra.mxu0 0.0
        %470 = vmatprep.subr.mxu0 0.0
        %471 = vmatpush1.msra.mxu0 0.0
        %472 = vmatprep.subr.mxu0 0.0
        %473 = vmatpush1.msra.mxu0 0.0
        %474 = vmatprep.subr.mxu0 0.0
        %475 = vmatpush1.msra.mxu0 0.0
        %476 = vmatprep.subr.mxu0 0.0
        %477 = vmatpush1.msra.mxu0 0.0
        %478 = vmatprep.subr.mxu0 0.0
        %479 = vmatpush1.msra.mxu0 0.0
        %480 = vmatprep.subr.mxu0 0.0
        %481 = vmatpush1.msra.mxu0 0.0
        %482 = vmatprep.mubr.f32.mxu0 0.0
        %v483 = vand.u32 %v411, 4294901760
        %v484 = vsub.f32 %v411, %v483
        %v485 = vand.u32 %v484, 4294901760
        %v486 = vsub.f32 %v484, %v485
        %v487 = vand.u32 %v486, 4294901760
        %488 = vmatmul.mubr.f32.gmra.mrb[0].mxu0 %v487
        %v489 = vpop.f32.mrb[0].mxu0
        %v490 = vadd.f32 0.0, %v489
        %v491 = vpop.f32.mrb[0].mxu0
        %v492 = vadd.f32 0.0, %v491
        %493 = vmatprep.mubr.f32.mxu0 0.0
        %v494 = vand.u32 %v414, 4294901760
        %v495 = vsub.f32 %v414, %v494
        %v496 = vand.u32 %v495, 4294901760
        %v497 = vsub.f32 %v495, %v496
        %v498 = vand.u32 %v497, 4294901760
        %499 = vmatmul.mubr.f32.gmra.mrb[0].mxu0 %v498
        %v500 = vpop.f32.mrb[0].mxu0
        %v501 = vadd.f32 0.0, %v500
        %v502 = vpop.f32.mrb[0].mxu0
        %v503 = vadd.f32 0.0, %v502
        %504 = vdwg.mxu0
        %v505 = vand.u32 %v404, 4294901760
        %v506 = vsub.f32 %v404, %v505
        %v507 = vand.u32 %v506, 4294901760
        %v508 = vsub.f32 %v506, %v507
        %v509 = vand.u32 %v508, 4294901760
        %510 = vmatprep.subr.mxu0 %v509
        %v511 = vand.u32 %v403, 4294901760
        %v512 = vsub.f32 %v403, %v511
        %v513 = vand.u32 %v512, 4294901760
        %v514 = vsub.f32 %v512, %v513
        %v515 = vand.u32 %v514, 4294901760
        %516 = vmatpush1.msra.mxu0 %v515
        %517 = vmatprep.subr.mxu0 0.0
        %518 = vmatpush1.msra.mxu0 0.0
        %519 = vmatprep.subr.mxu0 0.0
        %520 = vmatpush1.msra.mxu0 0.0
        %521 = vmatprep.subr.mxu0 0.0
        %522 = vmatpush1.msra.mxu0 0.0
        %523 = vmatprep.subr.mxu0 0.0
        %524 = vmatpush1.msra.mxu0 0.0
        %525 = vmatprep.subr.mxu0 0.0
        %526 = vmatpush1.msra.mxu0 0.0
        %527 = vmatprep.subr.mxu0 0.0
        %528 = vmatpush1.msra.mxu0 0.0
        %529 = vmatprep.subr.mxu0 0.0
        %530 = vmatpush1.msra.mxu0 0.0
        %531 = vmatprep.subr.mxu0 0.0
        %532 = vmatpush1.msra.mxu0 0.0
        %533 = vmatprep.subr.mxu0 0.0
        %534 = vmatpush1.msra.mxu0 0.0
        %535 = vmatprep.subr.mxu0 0.0
        %536 = vmatpush1.msra.mxu0 0.0
        %537 = vmatprep.subr.mxu0 0.0
        %538 = vmatpush1.msra.mxu0 0.0
        %539 = vmatprep.subr.mxu0 0.0
        %540 = vmatpush1.msra.mxu0 0.0
        %541 = vmatprep.subr.mxu0 0.0
        %542 = vmatpush1.msra.mxu0 0.0
        %543 = vmatprep.subr.mxu0 0.0
        %544 = vmatpush1.msra.mxu0 0.0
        %545 = vmatprep.subr.mxu0 0.0
        %546 = vmatpush1.msra.mxu0 0.0
        %547 = vmatprep.subr.mxu0 0.0
        %548 = vmatpush1.msra.mxu0 0.0
        %549 = vmatprep.subr.mxu0 0.0
        %550 = vmatpush1.msra.mxu0 0.0
        %551 = vmatprep.subr.mxu0 0.0
        %552 = vmatpush1.msra.mxu0 0.0
        %553 = vmatprep.subr.mxu0 0.0
        %554 = vmatpush1.msra.mxu0 0.0
        %555 = vmatprep.subr.mxu0 0.0
        %556 = vmatpush1.msra.mxu0 0.0
        %557 = vmatprep.subr.mxu0 0.0
        %558 = vmatpush1.msra.mxu0 0.0
        %559 = vmatprep.subr.mxu0 0.0
        %560 = vmatpush1.msra.mxu0 0.0
        %561 = vmatprep.subr.mxu0 0.0
        %562 = vmatpush1.msra.mxu0 0.0
        %563 = vmatprep.subr.mxu0 0.0
        %564 = vmatpush1.msra.mxu0 0.0
        %565 = vmatprep.subr.mxu0 0.0
        %566 = vmatpush1.msra.mxu0 0.0
        %567 = vmatprep.subr.mxu0 0.0
        %568 = vmatpush1.msra.mxu0 0.0
        %569 = vmatprep.subr.mxu0 0.0
        %570 = vmatpush1.msra.mxu0 0.0
        %571 = vmatprep.subr.mxu0 0.0
        %572 = vmatpush1.msra.mxu0 0.0
        %573 = vmatprep.subr.mxu0 0.0
        %574 = vmatpush1.msra.mxu0 0.0
        %575 = vmatprep.subr.mxu0 0.0
        %576 = vmatpush1.msra.mxu0 0.0
        %577 = vmatprep.subr.mxu0 0.0
        %578 = vmatpush1.msra.mxu0 0.0
        %579 = vmatprep.mubr.f32.mxu0 0.0
        %v580 = vand.u32 %v411, 4294901760
        %581 = vmatmul.mubr.f32.gmra.mrb[0].mxu0 %v580
        %v582 = vpop.f32.mrb[0].mxu0
        %v583 = vadd.f32 %v490, %v582
        %v584 = vpop.f32.mrb[0].mxu0
        %v585 = vadd.f32 %v492, %v584
        %586 = vmatprep.mubr.f32.mxu0 0.0
        %v587 = vand.u32 %v414, 4294901760
        %588 = vmatmul.mubr.f32.gmra.mrb[0].mxu0 %v587
        %v589 = vpop.f32.mrb[0].mxu0
        %v590 = vadd.f32 %v501, %v589
        %v591 = vpop.f32.mrb[0].mxu0
        %v592 = vadd.f32 %v503, %v591
        %593 = vdwg.mxu0
        %v594 = vand.u32 %v404, 4294901760
        %v595 = vsub.f32 %v404, %v594
        %596 = vmatprep.subr.mxu0 %v595
        %v597 = vand.u32 %v403, 4294901760
        %v598 = vsub.f32 %v403, %v597
        %599 = vmatpush1.msra.mxu0 %v598
        %600 = vmatprep.subr.mxu0 0.0
        %601 = vmatpush1.msra.mxu0 0.0
        %602 = vmatprep.subr.mxu0 0.0
        %603 = vmatpush1.msra.mxu0 0.0
        %604 = vmatprep.subr.mxu0 0.0
        %605 = vmatpush1.msra.mxu0 0.0
        %606 = vmatprep.subr.mxu0 0.0
        %607 = vmatpush1.msra.mxu0 0.0
        %608 = vmatprep.subr.mxu0 0.0
        %609 = vmatpush1.msra.mxu0 0.0
        %610 = vmatprep.subr.mxu0 0.0
        %611 = vmatpush1.msra.mxu0 0.0
        %612 = vmatprep.subr.mxu0 0.0
        %613 = vmatpush1.msra.mxu0 0.0
        %614 = vmatprep.subr.mxu0 0.0
        %615 = vmatpush1.msra.mxu0 0.0
        %616 = vmatprep.subr.mxu0 0.0
        %617 = vmatpush1.msra.mxu0 0.0
        %618 = vmatprep.subr.mxu0 0.0
        %619 = vmatpush1.msra.mxu0 0.0
        %620 = vmatprep.subr.mxu0 0.0
        %621 = vmatpush1.msra.mxu0 0.0
        %622 = vmatprep.subr.mxu0 0.0
        %623 = vmatpush1.msra.mxu0 0.0
        %624 = vmatprep.subr.mxu0 0.0
        %625 = vmatpush1.msra.mxu0 0.0
        %626 = vmatprep.subr.mxu0 0.0
        %627 = vmatpush1.msra.mxu0 0.0
        %628 = vmatprep.subr.mxu0 0.0
        %629 = vmatpush1.msra.mxu0 0.0
        %630 = vmatprep.subr.mxu0 0.0
        %631 = vmatpush1.msra.mxu0 0.0
        %632 = vmatprep.subr.mxu0 0.0
        %633 = vmatpush1.msra.mxu0 0.0
        %634 = vmatprep.subr.mxu0 0.0
        %635 = vmatpush1.msra.mxu0 0.0
        %636 = vmatprep.subr.mxu0 0.0
        %637 = vmatpush1.msra.mxu0 0.0
        %638 = vmatprep.subr.mxu0 0.0
        %639 = vmatpush1.msra.mxu0 0.0
        %640 = vmatprep.subr.mxu0 0.0
        %641 = vmatpush1.msra.mxu0 0.0
        %642 = vmatprep.subr.mxu0 0.0
        %643 = vmatpush1.msra.mxu0 0.0
        %644 = vmatprep.subr.mxu0 0.0
        %645 = vmatpush1.msra.mxu0 0.0
        %646 = vmatprep.subr.mxu0 0.0
        %647 = vmatpush1.msra.mxu0 0.0
        %648 = vmatprep.subr.mxu0 0.0
        %649 = vmatpush1.msra.mxu0 0.0
        %650 = vmatprep.subr.mxu0 0.0
        %651 = vmatpush1.msra.mxu0 0.0
        %652 = vmatprep.subr.mxu0 0.0
        %653 = vmatpush1.msra.mxu0 0.0
        %654 = vmatprep.subr.mxu0 0.0
        %655 = vmatpush1.msra.mxu0 0.0
        %656 = vmatprep.subr.mxu0 0.0
        %657 = vmatpush1.msra.mxu0 0.0
        %658 = vmatprep.subr.mxu0 0.0
        %659 = vmatpush1.msra.mxu0 0.0
        %660 = vmatprep.subr.mxu0 0.0
        %661 = vmatpush1.msra.mxu0 0.0
        %662 = vmatprep.mubr.f32.mxu0 0.0
        %v663 = vand.u32 %v411, 4294901760
        %v664 = vsub.f32 %v411, %v663
        %665 = vmatmul.mubr.f32.gmra.mrb[0].mxu0 %v664
        %v666 = vpop.f32.mrb[0].mxu0
        %v667 = vadd.f32 %v583, %v666
        %v668 = vpop.f32.mrb[0].mxu0
        %v669 = vadd.f32 %v585, %v668
        %670 = vmatprep.mubr.f32.mxu0 0.0
        %v671 = vand.u32 %v414, 4294901760
        %v672 = vsub.f32 %v414, %v671
        %673 = vmatmul.mubr.f32.gmra.mrb[0].mxu0 %v672
        %v674 = vpop.f32.mrb[0].mxu0
        %v675 = vadd.f32 %v590, %v674
        %v676 = vpop.f32.mrb[0].mxu0
        %v677 = vadd.f32 %v592, %v676
        %678 = vdwg.mxu0
        %v679 = vand.u32 %v404, 4294901760
        %680 = vmatprep.subr.mxu0 %v679
        %v681 = vand.u32 %v403, 4294901760
        %682 = vmatpush1.msra.mxu0 %v681
        %683 = vmatprep.subr.mxu0 0.0
        %684 = vmatpush1.msra.mxu0 0.0
        %685 = vmatprep.subr.mxu0 0.0
        %686 = vmatpush1.msra.mxu0 0.0
        %687 = vmatprep.subr.mxu0 0.0
        %688 = vmatpush1.msra.mxu0 0.0
        %689 = vmatprep.subr.mxu0 0.0
        %690 = vmatpush1.msra.mxu0 0.0
        %691 = vmatprep.subr.mxu0 0.0
        %692 = vmatpush1.msra.mxu0 0.0
        %693 = vmatprep.subr.mxu0 0.0
        %694 = vmatpush1.msra.mxu0 0.0
        %695 = vmatprep.subr.mxu0 0.0
        %696 = vmatpush1.msra.mxu0 0.0
        %697 = vmatprep.subr.mxu0 0.0
        %698 = vmatpush1.msra.mxu0 0.0
        %699 = vmatprep.subr.mxu0 0.0
        %700 = vmatpush1.msra.mxu0 0.0
        %701 = vmatprep.subr.mxu0 0.0
        %702 = vmatpush1.msra.mxu0 0.0
        %703 = vmatprep.subr.mxu0 0.0
        %704 = vmatpush1.msra.mxu0 0.0
        %705 = vmatprep.subr.mxu0 0.0
        %706 = vmatpush1.msra.mxu0 0.0
        %707 = vmatprep.subr.mxu0 0.0
        %708 = vmatpush1.msra.mxu0 0.0
        %709 = vmatprep.subr.mxu0 0.0
        %710 = vmatpush1.msra.mxu0 0.0
        %711 = vmatprep.subr.mxu0 0.0
        %712 = vmatpush1.msra.mxu0 0.0
        %713 = vmatprep.subr.mxu0 0.0
        %714 = vmatpush1.msra.mxu0 0.0
        %715 = vmatprep.subr.mxu0 0.0
        %716 = vmatpush1.msra.mxu0 0.0
        %717 = vmatprep.subr.mxu0 0.0
        %718 = vmatpush1.msra.mxu0 0.0
        %719 = vmatprep.subr.mxu0 0.0
        %720 = vmatpush1.msra.mxu0 0.0
        %721 = vmatprep.subr.mxu0 0.0
        %722 = vmatpush1.msra.mxu0 0.0
        %723 = vmatprep.subr.mxu0 0.0
        %724 = vmatpush1.msra.mxu0 0.0
        %725 = vmatprep.subr.mxu0 0.0
        %726 = vmatpush1.msra.mxu0 0.0
        %727 = vmatprep.subr.mxu0 0.0
        %728 = vmatpush1.msra.mxu0 0.0
        %729 = vmatprep.subr.mxu0 0.0
        %730 = vmatpush1.msra.mxu0 0.0
        %731 = vmatprep.subr.mxu0 0.0
        %732 = vmatpush1.msra.mxu0 0.0
        %733 = vmatprep.subr.mxu0 0.0
        %734 = vmatpush1.msra.mxu0 0.0
        %735 = vmatprep.subr.mxu0 0.0
        %736 = vmatpush1.msra.mxu0 0.0
        %737 = vmatprep.subr.mxu0 0.0
        %738 = vmatpush1.msra.mxu0 0.0
        %739 = vmatprep.subr.mxu0 0.0
        %740 = vmatpush1.msra.mxu0 0.0
        %741 = vmatprep.subr.mxu0 0.0
        %742 = vmatpush1.msra.mxu0 0.0
        %743 = vmatprep.subr.mxu0 0.0
        %744 = vmatpush1.msra.mxu0 0.0
        %745 = vmatprep.mubr.f32.mxu0 0.0
        %v746 = vand.u32 %v411, 4294901760
        %v747 = vsub.f32 %v411, %v746
        %v748 = vand.u32 %v747, 4294901760
        %749 = vmatmul.mubr.f32.gmra.mrb[0].mxu0 %v748
        %v750 = vpop.f32.mrb[0].mxu0
        %v751 = vadd.f32 %v667, %v750
        %v752 = vpop.f32.mrb[0].mxu0
        %v753 = vadd.f32 %v669, %v752
        %754 = vmatprep.mubr.f32.mxu0 0.0
        %v755 = vand.u32 %v414, 4294901760
        %v756 = vsub.f32 %v414, %v755
        %v757 = vand.u32 %v756, 4294901760
        %758 = vmatmul.mubr.f32.gmra.mrb[0].mxu0 %v757
        %v759 = vpop.f32.mrb[0].mxu0
        %v760 = vadd.f32 %v675, %v759
        %v761 = vpop.f32.mrb[0].mxu0
        %v762 = vadd.f32 %v677, %v761
        %763 = vdwg.mxu0
        %v764 = vand.u32 %v404, 4294901760
        %v765 = vsub.f32 %v404, %v764
        %v766 = vand.u32 %v765, 4294901760
        %767 = vmatprep.subr.mxu0 %v766
        %v768 = vand.u32 %v403, 4294901760
        %v769 = vsub.f32 %v403, %v768
        %v770 = vand.u32 %v769, 4294901760
        %771 = vmatpush1.msra.mxu0 %v770
        %772 = vmatprep.subr.mxu0 0.0
        %773 = vmatpush1.msra.mxu0 0.0
        %774 = vmatprep.subr.mxu0 0.0
        %775 = vmatpush1.msra.mxu0 0.0
        %776 = vmatprep.subr.mxu0 0.0
        %777 = vmatpush1.msra.mxu0 0.0
        %778 = vmatprep.subr.mxu0 0.0
        %779 = vmatpush1.msra.mxu0 0.0
        %780 = vmatprep.subr.mxu0 0.0
        %781 = vmatpush1.msra.mxu0 0.0
        %782 = vmatprep.subr.mxu0 0.0
        %783 = vmatpush1.msra.mxu0 0.0
        %784 = vmatprep.subr.mxu0 0.0
        %785 = vmatpush1.msra.mxu0 0.0
        %786 = vmatprep.subr.mxu0 0.0
        %787 = vmatpush1.msra.mxu0 0.0
        %788 = vmatprep.subr.mxu0 0.0
        %789 = vmatpush1.msra.mxu0 0.0
        %790 = vmatprep.subr.mxu0 0.0
        %791 = vmatpush1.msra.mxu0 0.0
        %792 = vmatprep.subr.mxu0 0.0
        %793 = vmatpush1.msra.mxu0 0.0
        %794 = vmatprep.subr.mxu0 0.0
        %795 = vmatpush1.msra.mxu0 0.0
        %796 = vmatprep.subr.mxu0 0.0
        %797 = vmatpush1.msra.mxu0 0.0
        %798 = vmatprep.subr.mxu0 0.0
        %799 = vmatpush1.msra.mxu0 0.0
        %800 = vmatprep.subr.mxu0 0.0
        %801 = vmatpush1.msra.mxu0 0.0
        %802 = vmatprep.subr.mxu0 0.0
        %803 = vmatpush1.msra.mxu0 0.0
        %804 = vmatprep.subr.mxu0 0.0
        %805 = vmatpush1.msra.mxu0 0.0
        %806 = vmatprep.subr.mxu0 0.0
        %807 = vmatpush1.msra.mxu0 0.0
        %808 = vmatprep.subr.mxu0 0.0
        %809 = vmatpush1.msra.mxu0 0.0
        %810 = vmatprep.subr.mxu0 0.0
        %811 = vmatpush1.msra.mxu0 0.0
        %812 = vmatprep.subr.mxu0 0.0
        %813 = vmatpush1.msra.mxu0 0.0
        %814 = vmatprep.subr.mxu0 0.0
        %815 = vmatpush1.msra.mxu0 0.0
        %816 = vmatprep.subr.mxu0 0.0
        %817 = vmatpush1.msra.mxu0 0.0
        %818 = vmatprep.subr.mxu0 0.0
        %819 = vmatpush1.msra.mxu0 0.0
        %820 = vmatprep.subr.mxu0 0.0
        %821 = vmatpush1.msra.mxu0 0.0
        %822 = vmatprep.subr.mxu0 0.0
        %823 = vmatpush1.msra.mxu0 0.0
        %824 = vmatprep.subr.mxu0 0.0
        %825 = vmatpush1.msra.mxu0 0.0
        %826 = vmatprep.subr.mxu0 0.0
        %827 = vmatpush1.msra.mxu0 0.0
        %828 = vmatprep.subr.mxu0 0.0
        %829 = vmatpush1.msra.mxu0 0.0
        %830 = vmatprep.subr.mxu0 0.0
        %831 = vmatpush1.msra.mxu0 0.0
        %832 = vmatprep.subr.mxu0 0.0
        %833 = vmatpush1.msra.mxu0 0.0
        %834 = vmatprep.mubr.f32.mxu0 0.0
        %v835 = vand.u32 %v411, 4294901760
        %836 = vmatmul.mubr.f32.gmra.mrb[0].mxu0 %v835
        %v837 = vpop.f32.mrb[0].mxu0
        %v838 = vadd.f32 %v751, %v837
        %v839 = vpop.f32.mrb[0].mxu0
        %v840 = vadd.f32 %v753, %v839
        %841 = vmatprep.mubr.f32.mxu0 0.0
        %v842 = vand.u32 %v414, 4294901760
        %843 = vmatmul.mubr.f32.gmra.mrb[0].mxu0 %v842
        %v844 = vpop.f32.mrb[0].mxu0
        %v845 = vadd.f32 %v760, %v844
        %v846 = vpop.f32.mrb[0].mxu0
        %v847 = vadd.f32 %v762, %v846
        %848 = vdwg.mxu0
        %v849 = vand.u32 %v404, 4294901760
        %850 = vmatprep.subr.mxu0 %v849
        %v851 = vand.u32 %v403, 4294901760
        %852 = vmatpush1.msra.mxu0 %v851
        %853 = vmatprep.subr.mxu0 0.0
        %854 = vmatpush1.msra.mxu0 0.0
        %855 = vmatprep.subr.mxu0 0.0
        %856 = vmatpush1.msra.mxu0 0.0
        %857 = vmatprep.subr.mxu0 0.0
        %858 = vmatpush1.msra.mxu0 0.0
        %859 = vmatprep.subr.mxu0 0.0
        %860 = vmatpush1.msra.mxu0 0.0
        %861 = vmatprep.subr.mxu0 0.0
        %862 = vmatpush1.msra.mxu0 0.0
        %863 = vmatprep.subr.mxu0 0.0
        %864 = vmatpush1.msra.mxu0 0.0
        %865 = vmatprep.subr.mxu0 0.0
        %866 = vmatpush1.msra.mxu0 0.0
        %867 = vmatprep.subr.mxu0 0.0
        %868 = vmatpush1.msra.mxu0 0.0
        %869 = vmatprep.subr.mxu0 0.0
        %870 = vmatpush1.msra.mxu0 0.0
        %871 = vmatprep.subr.mxu0 0.0
        %872 = vmatpush1.msra.mxu0 0.0
        %873 = vmatprep.subr.mxu0 0.0
        %874 = vmatpush1.msra.mxu0 0.0
        %875 = vmatprep.subr.mxu0 0.0
        %876 = vmatpush1.msra.mxu0 0.0
        %877 = vmatprep.subr.mxu0 0.0
        %878 = vmatpush1.msra.mxu0 0.0
        %879 = vmatprep.subr.mxu0 0.0
        %880 = vmatpush1.msra.mxu0 0.0
        %881 = vmatprep.subr.mxu0 0.0
        %882 = vmatpush1.msra.mxu0 0.0
        %883 = vmatprep.subr.mxu0 0.0
        %884 = vmatpush1.msra.mxu0 0.0
        %885 = vmatprep.subr.mxu0 0.0
        %886 = vmatpush1.msra.mxu0 0.0
        %887 = vmatprep.subr.mxu0 0.0
        %888 = vmatpush1.msra.mxu0 0.0
        %889 = vmatprep.subr.mxu0 0.0
        %890 = vmatpush1.msra.mxu0 0.0
        %891 = vmatprep.subr.mxu0 0.0
        %892 = vmatpush1.msra.mxu0 0.0
        %893 = vmatprep.subr.mxu0 0.0
        %894 = vmatpush1.msra.mxu0 0.0
        %895 = vmatprep.subr.mxu0 0.0
        %896 = vmatpush1.msra.mxu0 0.0
        %897 = vmatprep.subr.mxu0 0.0
        %898 = vmatpush1.msra.mxu0 0.0
        %899 = vmatprep.subr.mxu0 0.0
        %900 = vmatpush1.msra.mxu0 0.0
        %901 = vmatprep.subr.mxu0 0.0
        %902 = vmatpush1.msra.mxu0 0.0
        %903 = vmatprep.subr.mxu0 0.0
        %904 = vmatpush1.msra.mxu0 0.0
        %905 = vmatprep.subr.mxu0 0.0
        %906 = vmatpush1.msra.mxu0 0.0
        %907 = vmatprep.subr.mxu0 0.0
        %908 = vmatpush1.msra.mxu0 0.0
        %909 = vmatprep.subr.mxu0 0.0
        %910 = vmatpush1.msra.mxu0 0.0
        %911 = vmatprep.subr.mxu0 0.0
        %912 = vmatpush1.msra.mxu0 0.0
        %913 = vmatprep.subr.mxu0 0.0
        %914 = vmatpush1.msra.mxu0 0.0
        %915 = vmatprep.mubr.f32.mxu0 0.0
        %v916 = vand.u32 %v411, 4294901760
        %917 = vmatmul.mubr.f32.gmra.mrb[0].mxu0 %v916
        %v918 = vpop.f32.mrb[0].mxu0
        %v919 = vadd.f32 %v838, %v918
        %v920 = vpop.f32.mrb[0].mxu0
        %v921 = vadd.f32 %v840, %v920
        %922 = vmatprep.mubr.f32.mxu0 0.0
        %v923 = vand.u32 %v414, 4294901760
        %924 = vmatmul.mubr.f32.gmra.mrb[0].mxu0 %v923
        %v925 = vpop.f32.mrb[0].mxu0
        %v926 = vadd.f32 %v845, %v925
        %v927 = vpop.f32.mrb[0].mxu0
        %v928 = vadd.f32 %v847, %v927
        %929 = vdwg.mxu0
        %v930 = vand.u32 %v406, 4294901760
        %931 = vmatprep.subr.mxu0 %v930
        %v932 = vand.u32 %v405, 4294901760
        %933 = vmatpush1.msra.mxu0 %v932
        %934 = vmatprep.subr.mxu0 0.0
        %935 = vmatpush1.msra.mxu0 0.0
        %936 = vmatprep.subr.mxu0 0.0
        %937 = vmatpush1.msra.mxu0 0.0
        %938 = vmatprep.subr.mxu0 0.0
        %939 = vmatpush1.msra.mxu0 0.0
        %940 = vmatprep.subr.mxu0 0.0
        %941 = vmatpush1.msra.mxu0 0.0
        %942 = vmatprep.subr.mxu0 0.0
        %943 = vmatpush1.msra.mxu0 0.0
        %944 = vmatprep.subr.mxu0 0.0
        %945 = vmatpush1.msra.mxu0 0.0
        %946 = vmatprep.subr.mxu0 0.0
        %947 = vmatpush1.msra.mxu0 0.0
        %948 = vmatprep.subr.mxu0 0.0
        %949 = vmatpush1.msra.mxu0 0.0
        %950 = vmatprep.subr.mxu0 0.0
        %951 = vmatpush1.msra.mxu0 0.0
        %952 = vmatprep.subr.mxu0 0.0
        %953 = vmatpush1.msra.mxu0 0.0
        %954 = vmatprep.subr.mxu0 0.0
        %955 = vmatpush1.msra.mxu0 0.0
        %956 = vmatprep.subr.mxu0 0.0
        %957 = vmatpush1.msra.mxu0 0.0
        %958 = vmatprep.subr.mxu0 0.0
        %959 = vmatpush1.msra.mxu0 0.0
        %960 = vmatprep.subr.mxu0 0.0
        %961 = vmatpush1.msra.mxu0 0.0
        %962 = vmatprep.subr.mxu0 0.0
        %963 = vmatpush1.msra.mxu0 0.0
        %964 = vmatprep.subr.mxu0 0.0
        %965 = vmatpush1.msra.mxu0 0.0
        %966 = vmatprep.subr.mxu0 0.0
        %967 = vmatpush1.msra.mxu0 0.0
        %968 = vmatprep.subr.mxu0 0.0
        %969 = vmatpush1.msra.mxu0 0.0
        %970 = vmatprep.subr.mxu0 0.0
        %971 = vmatpush1.msra.mxu0 0.0
        %972 = vmatprep.subr.mxu0 0.0
        %973 = vmatpush1.msra.mxu0 0.0
        %974 = vmatprep.subr.mxu0 0.0
        %975 = vmatpush1.msra.mxu0 0.0
        %976 = vmatprep.subr.mxu0 0.0
        %977 = vmatpush1.msra.mxu0 0.0
        %978 = vmatprep.subr.mxu0 0.0
        %979 = vmatpush1.msra.mxu0 0.0
        %980 = vmatprep.subr.mxu0 0.0
        %981 = vmatpush1.msra.mxu0 0.0
        %982 = vmatprep.subr.mxu0 0.0
        %983 = vmatpush1.msra.mxu0 0.0
        %984 = vmatprep.subr.mxu0 0.0
        %985 = vmatpush1.msra.mxu0 0.0
        %986 = vmatprep.subr.mxu0 0.0
        %987 = vmatpush1.msra.mxu0 0.0
        %988 = vmatprep.subr.mxu0 0.0
        %989 = vmatpush1.msra.mxu0 0.0
        %990 = vmatprep.subr.mxu0 0.0
        %991 = vmatpush1.msra.mxu0 0.0
        %992 = vmatprep.subr.mxu0 0.0
        %993 = vmatpush1.msra.mxu0 0.0
        %994 = vmatprep.subr.mxu0 0.0
        %995 = vmatpush1.msra.mxu0 0.0
        %996 = vmatprep.mubr.f32.mxu0 0.0
        %v997 = vand.u32 %v411, 4294901760
        %v998 = vsub.f32 %v411, %v997
        %v999 = vand.u32 %v998, 4294901760
        %v1000 = vsub.f32 %v998, %v999
        %v1001 = vand.u32 %v1000, 4294901760
        %1002 = vmatmul.mubr.f32.gmra.mrb[0].mxu0 %v1001
        %v1003 = vpop.f32.mrb[0].mxu0
        %v1004 = vadd.f32 0.0, %v1003
        %v1005 = vpop.f32.mrb[0].mxu0
        %v1006 = vadd.f32 0.0, %v1005
        %1007 = vmatprep.mubr.f32.mxu0 0.0
        %v1008 = vand.u32 %v414, 4294901760
        %v1009 = vsub.f32 %v414, %v1008
        %v1010 = vand.u32 %v1009, 4294901760
        %v1011 = vsub.f32 %v1009, %v1010
        %v1012 = vand.u32 %v1011, 4294901760
        %1013 = vmatmul.mubr.f32.gmra.mrb[0].mxu0 %v1012
        %v1014 = vpop.f32.mrb[0].mxu0
        %v1015 = vadd.f32 0.0, %v1014
        %v1016 = vpop.f32.mrb[0].mxu0
        %v1017 = vadd.f32 0.0, %v1016
        %1018 = vdwg.mxu0
        %v1019 = vand.u32 %v406, 4294901760
        %v1020 = vsub.f32 %v406, %v1019
        %v1021 = vand.u32 %v1020, 4294901760
        %v1022 = vsub.f32 %v1020, %v1021
        %v1023 = vand.u32 %v1022, 4294901760
        %1024 = vmatprep.subr.mxu0 %v1023
        %v1025 = vand.u32 %v405, 4294901760
        %v1026 = vsub.f32 %v405, %v1025
        %v1027 = vand.u32 %v1026, 4294901760
        %v1028 = vsub.f32 %v1026, %v1027
        %v1029 = vand.u32 %v1028, 4294901760
        %1030 = vmatpush1.msra.mxu0 %v1029
        %1031 = vmatprep.subr.mxu0 0.0
        %1032 = vmatpush1.msra.mxu0 0.0
        %1033 = vmatprep.subr.mxu0 0.0
        %1034 = vmatpush1.msra.mxu0 0.0
        %1035 = vmatprep.subr.mxu0 0.0
        %1036 = vmatpush1.msra.mxu0 0.0
        %1037 = vmatprep.subr.mxu0 0.0
        %1038 = vmatpush1.msra.mxu0 0.0
        %1039 = vmatprep.subr.mxu0 0.0
        %1040 = vmatpush1.msra.mxu0 0.0
        %1041 = vmatprep.subr.mxu0 0.0
        %1042 = vmatpush1.msra.mxu0 0.0
        %1043 = vmatprep.subr.mxu0 0.0
        %1044 = vmatpush1.msra.mxu0 0.0
        %1045 = vmatprep.subr.mxu0 0.0
        %1046 = vmatpush1.msra.mxu0 0.0
        %1047 = vmatprep.subr.mxu0 0.0
        %1048 = vmatpush1.msra.mxu0 0.0
        %1049 = vmatprep.subr.mxu0 0.0
        %1050 = vmatpush1.msra.mxu0 0.0
        %1051 = vmatprep.subr.mxu0 0.0
        %1052 = vmatpush1.msra.mxu0 0.0
        %1053 = vmatprep.subr.mxu0 0.0
        %1054 = vmatpush1.msra.mxu0 0.0
        %1055 = vmatprep.subr.mxu0 0.0
        %1056 = vmatpush1.msra.mxu0 0.0
        %1057 = vmatprep.subr.mxu0 0.0
        %1058 = vmatpush1.msra.mxu0 0.0
        %1059 = vmatprep.subr.mxu0 0.0
        %1060 = vmatpush1.msra.mxu0 0.0
        %1061 = vmatprep.subr.mxu0 0.0
        %1062 = vmatpush1.msra.mxu0 0.0
        %1063 = vmatprep.subr.mxu0 0.0
        %1064 = vmatpush1.msra.mxu0 0.0
        %1065 = vmatprep.subr.mxu0 0.0
        %1066 = vmatpush1.msra.mxu0 0.0
        %1067 = vmatprep.subr.mxu0 0.0
        %1068 = vmatpush1.msra.mxu0 0.0
        %1069 = vmatprep.subr.mxu0 0.0
        %1070 = vmatpush1.msra.mxu0 0.0
        %1071 = vmatprep.subr.mxu0 0.0
        %1072 = vmatpush1.msra.mxu0 0.0
        %1073 = vmatprep.subr.mxu0 0.0
        %1074 = vmatpush1.msra.mxu0 0.0
        %1075 = vmatprep.subr.mxu0 0.0
        %1076 = vmatpush1.msra.mxu0 0.0
        %1077 = vmatprep.subr.mxu0 0.0
        %1078 = vmatpush1.msra.mxu0 0.0
        %1079 = vmatprep.subr.mxu0 0.0
        %1080 = vmatpush1.msra.mxu0 0.0
        %1081 = vmatprep.subr.mxu0 0.0
        %1082 = vmatpush1.msra.mxu0 0.0
        %1083 = vmatprep.subr.mxu0 0.0
        %1084 = vmatpush1.msra.mxu0 0.0
        %1085 = vmatprep.subr.mxu0 0.0
        %1086 = vmatpush1.msra.mxu0 0.0
        %1087 = vmatprep.subr.mxu0 0.0
        %1088 = vmatpush1.msra.mxu0 0.0
        %1089 = vmatprep.subr.mxu0 0.0
        %1090 = vmatpush1.msra.mxu0 0.0
        %1091 = vmatprep.subr.mxu0 0.0
        %1092 = vmatpush1.msra.mxu0 0.0
        %1093 = vmatprep.mubr.f32.mxu0 0.0
        %v1094 = vand.u32 %v411, 4294901760
        %1095 = vmatmul.mubr.f32.gmra.mrb[0].mxu0 %v1094
        %v1096 = vpop.f32.mrb[0].mxu0
        %v1097 = vadd.f32 %v1004, %v1096
        %v1098 = vpop.f32.mrb[0].mxu0
        %v1099 = vadd.f32 %v1006, %v1098
        %1100 = vmatprep.mubr.f32.mxu0 0.0
        %v1101 = vand.u32 %v414, 4294901760
        %1102 = vmatmul.mubr.f32.gmra.mrb[0].mxu0 %v1101
        %v1103 = vpop.f32.mrb[0].mxu0
        %v1104 = vadd.f32 %v1015, %v1103
        %v1105 = vpop.f32.mrb[0].mxu0
        %v1106 = vadd.f32 %v1017, %v1105
        %1107 = vdwg.mxu0
        %v1108 = vand.u32 %v406, 4294901760
        %v1109 = vsub.f32 %v406, %v1108
        %1110 = vmatprep.subr.mxu0 %v1109
        %v1111 = vand.u32 %v405, 4294901760
        %v1112 = vsub.f32 %v405, %v1111
        %1113 = vmatpush1.msra.mxu0 %v1112
        %1114 = vmatprep.subr.mxu0 0.0
        %1115 = vmatpush1.msra.mxu0 0.0
        %1116 = vmatprep.subr.mxu0 0.0
        %1117 = vmatpush1.msra.mxu0 0.0
        %1118 = vmatprep.subr.mxu0 0.0
        %1119 = vmatpush1.msra.mxu0 0.0
        %1120 = vmatprep.subr.mxu0 0.0
        %1121 = vmatpush1.msra.mxu0 0.0
        %1122 = vmatprep.subr.mxu0 0.0
        %1123 = vmatpush1.msra.mxu0 0.0
        %1124 = vmatprep.subr.mxu0 0.0
        %1125 = vmatpush1.msra.mxu0 0.0
        %1126 = vmatprep.subr.mxu0 0.0
        %1127 = vmatpush1.msra.mxu0 0.0
        %1128 = vmatprep.subr.mxu0 0.0
        %1129 = vmatpush1.msra.mxu0 0.0
        %1130 = vmatprep.subr.mxu0 0.0
        %1131 = vmatpush1.msra.mxu0 0.0
        %1132 = vmatprep.subr.mxu0 0.0
        %1133 = vmatpush1.msra.mxu0 0.0
        %1134 = vmatprep.subr.mxu0 0.0
        %1135 = vmatpush1.msra.mxu0 0.0
        %1136 = vmatprep.subr.mxu0 0.0
        %1137 = vmatpush1.msra.mxu0 0.0
        %1138 = vmatprep.subr.mxu0 0.0
        %1139 = vmatpush1.msra.mxu0 0.0
        %1140 = vmatprep.subr.mxu0 0.0
        %1141 = vmatpush1.msra.mxu0 0.0
        %1142 = vmatprep.subr.mxu0 0.0
        %1143 = vmatpush1.msra.mxu0 0.0
        %1144 = vmatprep.subr.mxu0 0.0
        %1145 = vmatpush1.msra.mxu0 0.0
        %1146 = vmatprep.subr.mxu0 0.0
        %1147 = vmatpush1.msra.mxu0 0.0
        %1148 = vmatprep.subr.mxu0 0.0
        %1149 = vmatpush1.msra.mxu0 0.0
        %1150 = vmatprep.subr.mxu0 0.0
        %1151 = vmatpush1.msra.mxu0 0.0
        %1152 = vmatprep.subr.mxu0 0.0
        %1153 = vmatpush1.msra.mxu0 0.0
        %1154 = vmatprep.subr.mxu0 0.0
        %1155 = vmatpush1.msra.mxu0 0.0
        %1156 = vmatprep.subr.mxu0 0.0
        %1157 = vmatpush1.msra.mxu0 0.0
        %1158 = vmatprep.subr.mxu0 0.0
        %1159 = vmatpush1.msra.mxu0 0.0
        %1160 = vmatprep.subr.mxu0 0.0
        %1161 = vmatpush1.msra.mxu0 0.0
        %1162 = vmatprep.subr.mxu0 0.0
        %1163 = vmatpush1.msra.mxu0 0.0
        %1164 = vmatprep.subr.mxu0 0.0
        %1165 = vmatpush1.msra.mxu0 0.0
        %1166 = vmatprep.subr.mxu0 0.0
        %1167 = vmatpush1.msra.mxu0 0.0
        %1168 = vmatprep.subr.mxu0 0.0
        %1169 = vmatpush1.msra.mxu0 0.0
        %1170 = vmatprep.subr.mxu0 0.0
        %1171 = vmatpush1.msra.mxu0 0.0
        %1172 = vmatprep.subr.mxu0 0.0
        %1173 = vmatpush1.msra.mxu0 0.0
        %1174 = vmatprep.subr.mxu0 0.0
        %1175 = vmatpush1.msra.mxu0 0.0
        %1176 = vmatprep.mubr.f32.mxu0 0.0
        %v1177 = vand.u32 %v411, 4294901760
        %v1178 = vsub.f32 %v411, %v1177
        %1179 = vmatmul.mubr.f32.gmra.mrb[0].mxu0 %v1178
        %v1180 = vpop.f32.mrb[0].mxu0
        %v1181 = vadd.f32 %v1097, %v1180
        %v1182 = vpop.f32.mrb[0].mxu0
        %v1183 = vadd.f32 %v1099, %v1182
        %1184 = vmatprep.mubr.f32.mxu0 0.0
        %v1185 = vand.u32 %v414, 4294901760
        %v1186 = vsub.f32 %v414, %v1185
        %1187 = vmatmul.mubr.f32.gmra.mrb[0].mxu0 %v1186
        %v1188 = vpop.f32.mrb[0].mxu0
        %v1189 = vadd.f32 %v1104, %v1188
        %v1190 = vpop.f32.mrb[0].mxu0
        %v1191 = vadd.f32 %v1106, %v1190
        %1192 = vdwg.mxu0
        %v1193 = vand.u32 %v406, 4294901760
        %1194 = vmatprep.subr.mxu0 %v1193
        %v1195 = vand.u32 %v405, 4294901760
        %1196 = vmatpush1.msra.mxu0 %v1195
        %1197 = vmatprep.subr.mxu0 0.0
        %1198 = vmatpush1.msra.mxu0 0.0
        %1199 = vmatprep.subr.mxu0 0.0
        %1200 = vmatpush1.msra.mxu0 0.0
        %1201 = vmatprep.subr.mxu0 0.0
        %1202 = vmatpush1.msra.mxu0 0.0
        %1203 = vmatprep.subr.mxu0 0.0
        %1204 = vmatpush1.msra.mxu0 0.0
        %1205 = vmatprep.subr.mxu0 0.0
        %1206 = vmatpush1.msra.mxu0 0.0
        %1207 = vmatprep.subr.mxu0 0.0
        %1208 = vmatpush1.msra.mxu0 0.0
        %1209 = vmatprep.subr.mxu0 0.0
        %1210 = vmatpush1.msra.mxu0 0.0
        %1211 = vmatprep.subr.mxu0 0.0
        %1212 = vmatpush1.msra.mxu0 0.0
        %1213 = vmatprep.subr.mxu0 0.0
        %1214 = vmatpush1.msra.mxu0 0.0
        %1215 = vmatprep.subr.mxu0 0.0
        %1216 = vmatpush1.msra.mxu0 0.0
        %1217 = vmatprep.subr.mxu0 0.0
        %1218 = vmatpush1.msra.mxu0 0.0
        %1219 = vmatprep.subr.mxu0 0.0
        %1220 = vmatpush1.msra.mxu0 0.0
        %1221 = vmatprep.subr.mxu0 0.0
        %1222 = vmatpush1.msra.mxu0 0.0
        %1223 = vmatprep.subr.mxu0 0.0
        %1224 = vmatpush1.msra.mxu0 0.0
        %1225 = vmatprep.subr.mxu0 0.0
        %1226 = vmatpush1.msra.mxu0 0.0
        %1227 = vmatprep.subr.mxu0 0.0
        %1228 = vmatpush1.msra.mxu0 0.0
        %1229 = vmatprep.subr.mxu0 0.0
        %1230 = vmatpush1.msra.mxu0 0.0
        %1231 = vmatprep.subr.mxu0 0.0
        %1232 = vmatpush1.msra.mxu0 0.0
        %1233 = vmatprep.subr.mxu0 0.0
        %1234 = vmatpush1.msra.mxu0 0.0
        %1235 = vmatprep.subr.mxu0 0.0
        %1236 = vmatpush1.msra.mxu0 0.0
        %1237 = vmatprep.subr.mxu0 0.0
        %1238 = vmatpush1.msra.mxu0 0.0
        %1239 = vmatprep.subr.mxu0 0.0
        %1240 = vmatpush1.msra.mxu0 0.0
        %1241 = vmatprep.subr.mxu0 0.0
        %1242 = vmatpush1.msra.mxu0 0.0
        %1243 = vmatprep.subr.mxu0 0.0
        %1244 = vmatpush1.msra.mxu0 0.0
        %1245 = vmatprep.subr.mxu0 0.0
        %1246 = vmatpush1.msra.mxu0 0.0
        %1247 = vmatprep.subr.mxu0 0.0
        %1248 = vmatpush1.msra.mxu0 0.0
        %1249 = vmatprep.subr.mxu0 0.0
        %1250 = vmatpush1.msra.mxu0 0.0
        %1251 = vmatprep.subr.mxu0 0.0
        %1252 = vmatpush1.msra.mxu0 0.0
        %1253 = vmatprep.subr.mxu0 0.0
        %1254 = vmatpush1.msra.mxu0 0.0
        %1255 = vmatprep.subr.mxu0 0.0
        %1256 = vmatpush1.msra.mxu0 0.0
        %1257 = vmatprep.subr.mxu0 0.0
        %1258 = vmatpush1.msra.mxu0 0.0
        %1259 = vmatprep.mubr.f32.mxu0 0.0
        %v1260 = vand.u32 %v411, 4294901760
        %v1261 = vsub.f32 %v411, %v1260
        %v1262 = vand.u32 %v1261, 4294901760
        %1263 = vmatmul.mubr.f32.gmra.mrb[0].mxu0 %v1262
        %v1264 = vpop.f32.mrb[0].mxu0
        %v1265 = vadd.f32 %v1181, %v1264
        %v1266 = vpop.f32.mrb[0].mxu0
        %v1267 = vadd.f32 %v1183, %v1266
        %1268 = vmatprep.mubr.f32.mxu0 0.0
        %v1269 = vand.u32 %v414, 4294901760
        %v1270 = vsub.f32 %v414, %v1269
        %v1271 = vand.u32 %v1270, 4294901760
        %1272 = vmatmul.mubr.f32.gmra.mrb[0].mxu0 %v1271
        %v1273 = vpop.f32.mrb[0].mxu0
        %v1274 = vadd.f32 %v1189, %v1273
        %v1275 = vpop.f32.mrb[0].mxu0
        %v1276 = vadd.f32 %v1191, %v1275
        %1277 = vdwg.mxu0
        %v1278 = vand.u32 %v406, 4294901760
        %v1279 = vsub.f32 %v406, %v1278
        %v1280 = vand.u32 %v1279, 4294901760
        %1281 = vmatprep.subr.mxu0 %v1280
        %v1282 = vand.u32 %v405, 4294901760
        %v1283 = vsub.f32 %v405, %v1282
        %v1284 = vand.u32 %v1283, 4294901760
        %1285 = vmatpush1.msra.mxu0 %v1284
        %1286 = vmatprep.subr.mxu0 0.0
        %1287 = vmatpush1.msra.mxu0 0.0
        %1288 = vmatprep.subr.mxu0 0.0
        %1289 = vmatpush1.msra.mxu0 0.0
        %1290 = vmatprep.subr.mxu0 0.0
        %1291 = vmatpush1.msra.mxu0 0.0
        %1292 = vmatprep.subr.mxu0 0.0
        %1293 = vmatpush1.msra.mxu0 0.0
        %1294 = vmatprep.subr.mxu0 0.0
        %1295 = vmatpush1.msra.mxu0 0.0
        %1296 = vmatprep.subr.mxu0 0.0
        %1297 = vmatpush1.msra.mxu0 0.0
        %1298 = vmatprep.subr.mxu0 0.0
        %1299 = vmatpush1.msra.mxu0 0.0
        %1300 = vmatprep.subr.mxu0 0.0
        %1301 = vmatpush1.msra.mxu0 0.0
        %1302 = vmatprep.subr.mxu0 0.0
        %1303 = vmatpush1.msra.mxu0 0.0
        %1304 = vmatprep.subr.mxu0 0.0
        %1305 = vmatpush1.msra.mxu0 0.0
        %1306 = vmatprep.subr.mxu0 0.0
        %1307 = vmatpush1.msra.mxu0 0.0
        %1308 = vmatprep.subr.mxu0 0.0
        %1309 = vmatpush1.msra.mxu0 0.0
        %1310 = vmatprep.subr.mxu0 0.0
        %1311 = vmatpush1.msra.mxu0 0.0
        %1312 = vmatprep.subr.mxu0 0.0
        %1313 = vmatpush1.msra.mxu0 0.0
        %1314 = vmatprep.subr.mxu0 0.0
        %1315 = vmatpush1.msra.mxu0 0.0
        %1316 = vmatprep.subr.mxu0 0.0
        %1317 = vmatpush1.msra.mxu0 0.0
        %1318 = vmatprep.subr.mxu0 0.0
        %1319 = vmatpush1.msra.mxu0 0.0
        %1320 = vmatprep.subr.mxu0 0.0
        %1321 = vmatpush1.msra.mxu0 0.0
        %1322 = vmatprep.subr.mxu0 0.0
        %1323 = vmatpush1.msra.mxu0 0.0
        %1324 = vmatprep.subr.mxu0 0.0
        %1325 = vmatpush1.msra.mxu0 0.0
        %1326 = vmatprep.subr.mxu0 0.0
        %1327 = vmatpush1.msra.mxu0 0.0
        %1328 = vmatprep.subr.mxu0 0.0
        %1329 = vmatpush1.msra.mxu0 0.0
        %1330 = vmatprep.subr.mxu0 0.0
        %1331 = vmatpush1.msra.mxu0 0.0
        %1332 = vmatprep.subr.mxu0 0.0
        %1333 = vmatpush1.msra.mxu0 0.0
        %1334 = vmatprep.subr.mxu0 0.0
        %1335 = vmatpush1.msra.mxu0 0.0
        %1336 = vmatprep.subr.mxu0 0.0
        %1337 = vmatpush1.msra.mxu0 0.0
        %1338 = vmatprep.subr.mxu0 0.0
        %1339 = vmatpush1.msra.mxu0 0.0
        %1340 = vmatprep.subr.mxu0 0.0
        %1341 = vmatpush1.msra.mxu0 0.0
        %1342 = vmatprep.subr.mxu0 0.0
        %1343 = vmatpush1.msra.mxu0 0.0
        %1344 = vmatprep.subr.mxu0 0.0
        %1345 = vmatpush1.msra.mxu0 0.0
        %1346 = vmatprep.subr.mxu0 0.0
        %1347 = vmatpush1.msra.mxu0 0.0
        %1348 = vmatprep.mubr.f32.mxu0 0.0
        %v1349 = vand.u32 %v411, 4294901760
        %1350 = vmatmul.mubr.f32.gmra.mrb[0].mxu0 %v1349
        %v1351 = vpop.f32.mrb[0].mxu0
        %v1352 = vadd.f32 %v1265, %v1351
        %v1353 = vpop.f32.mrb[0].mxu0
        %v1354 = vadd.f32 %v1267, %v1353
        %1355 = vmatprep.mubr.f32.mxu0 0.0
        %v1356 = vand.u32 %v414, 4294901760
        %1357 = vmatmul.mubr.f32.gmra.mrb[0].mxu0 %v1356
        %v1358 = vpop.f32.mrb[0].mxu0
        %v1359 = vadd.f32 %v1274, %v1358
        %v1360 = vpop.f32.mrb[0].mxu0
        %v1361 = vadd.f32 %v1276, %v1360
        %1362 = vdwg.mxu0
        %v1363 = vand.u32 %v406, 4294901760
        %1364 = vmatprep.subr.mxu0 %v1363
        %v1365 = vand.u32 %v405, 4294901760
        %1366 = vmatpush1.msra.mxu0 %v1365
        %1367 = vmatprep.subr.mxu0 0.0
        %1368 = vmatpush1.msra.mxu0 0.0
        %1369 = vmatprep.subr.mxu0 0.0
        %1370 = vmatpush1.msra.mxu0 0.0
        %1371 = vmatprep.subr.mxu0 0.0
        %1372 = vmatpush1.msra.mxu0 0.0
        %1373 = vmatprep.subr.mxu0 0.0
        %1374 = vmatpush1.msra.mxu0 0.0
        %1375 = vmatprep.subr.mxu0 0.0
        %1376 = vmatpush1.msra.mxu0 0.0
        %1377 = vmatprep.subr.mxu0 0.0
        %1378 = vmatpush1.msra.mxu0 0.0
        %1379 = vmatprep.subr.mxu0 0.0
        %1380 = vmatpush1.msra.mxu0 0.0
        %1381 = vmatprep.subr.mxu0 0.0
        %1382 = vmatpush1.msra.mxu0 0.0
        %1383 = vmatprep.subr.mxu0 0.0
        %1384 = vmatpush1.msra.mxu0 0.0
        %1385 = vmatprep.subr.mxu0 0.0
        %1386 = vmatpush1.msra.mxu0 0.0
        %1387 = vmatprep.subr.mxu0 0.0
        %1388 = vmatpush1.msra.mxu0 0.0
        %1389 = vmatprep.subr.mxu0 0.0
        %1390 = vmatpush1.msra.mxu0 0.0
        %1391 = vmatprep.subr.mxu0 0.0
        %1392 = vmatpush1.msra.mxu0 0.0
        %1393 = vmatprep.subr.mxu0 0.0
        %1394 = vmatpush1.msra.mxu0 0.0
        %1395 = vmatprep.subr.mxu0 0.0
        %1396 = vmatpush1.msra.mxu0 0.0
        %1397 = vmatprep.subr.mxu0 0.0
        %1398 = vmatpush1.msra.mxu0 0.0
        %1399 = vmatprep.subr.mxu0 0.0
        %1400 = vmatpush1.msra.mxu0 0.0
        %1401 = vmatprep.subr.mxu0 0.0
        %1402 = vmatpush1.msra.mxu0 0.0
        %1403 = vmatprep.subr.mxu0 0.0
        %1404 = vmatpush1.msra.mxu0 0.0
        %1405 = vmatprep.subr.mxu0 0.0
        %1406 = vmatpush1.msra.mxu0 0.0
        %1407 = vmatprep.subr.mxu0 0.0
        %1408 = vmatpush1.msra.mxu0 0.0
        %1409 = vmatprep.subr.mxu0 0.0
        %1410 = vmatpush1.msra.mxu0 0.0
        %1411 = vmatprep.subr.mxu0 0.0
        %1412 = vmatpush1.msra.mxu0 0.0
        %1413 = vmatprep.subr.mxu0 0.0
        %1414 = vmatpush1.msra.mxu0 0.0
        %1415 = vmatprep.subr.mxu0 0.0
        %1416 = vmatpush1.msra.mxu0 0.0
        %1417 = vmatprep.subr.mxu0 0.0
        %1418 = vmatpush1.msra.mxu0 0.0
        %1419 = vmatprep.subr.mxu0 0.0
        %1420 = vmatpush1.msra.mxu0 0.0
        %1421 = vmatprep.subr.mxu0 0.0
        %1422 = vmatpush1.msra.mxu0 0.0
        %1423 = vmatprep.subr.mxu0 0.0
        %1424 = vmatpush1.msra.mxu0 0.0
        %1425 = vmatprep.subr.mxu0 0.0
        %1426 = vmatpush1.msra.mxu0 0.0
        %1427 = vmatprep.subr.mxu0 0.0
        %1428 = vmatpush1.msra.mxu0 0.0
        %1429 = vmatprep.mubr.f32.mxu0 0.0
        %v1430 = vand.u32 %v411, 4294901760
        %1431 = vmatmul.mubr.f32.gmra.mrb[0].mxu0 %v1430
        %v1432 = vpop.f32.mrb[0].mxu0
        %v1433 = vadd.f32 %v1352, %v1432
        %v1434 = vpop.f32.mrb[0].mxu0
        %v1435 = vadd.f32 %v1354, %v1434
        %1436 = vmatprep.mubr.f32.mxu0 0.0
        %v1437 = vand.u32 %v414, 4294901760
        %1438 = vmatmul.mubr.f32.gmra.mrb[0].mxu0 %v1437
        %v1439 = vpop.f32.mrb[0].mxu0
        %v1440 = vadd.f32 %v1359, %v1439
        %v1441 = vpop.f32.mrb[0].mxu0
        %v1442 = vadd.f32 %v1361, %v1441
        %1443 = vdwg.mxu0
        %v1448 = vcombine.low %v919, %v921
        %v1449 = vcombine.low %v1433, %v1435
        %v1451 = vunpack.c.l.s4 1983009808
        %v1452 = vunpack.c.0.s8 %v1451
        %v1453 = vlaneseq
        %v1454 = vshrl.u32 %v1453, 7
        %v1455 = vsub.s32 %v1452, %v1454
        %v1456 = vrot.slane %v1448, %v1455
        %v1458 = vunpack.c.l.s4 1983009808
        %v1459 = vunpack.c.0.s8 %v1458
        %v1460 = vlaneseq
        %v1461 = vshrl.u32 %v1460, 7
        %v1462 = vsub.s32 %v1459, %v1461
        %v1463 = vrot.slane %v1449, %v1462
        %v1464 = vcombine.low %v1456, %v1463
        %v1465 = vcombine.high %v1456, %v1463
        %v1469 = vunpack.c.l.s4 1966171168
        %v1470 = vunpack.c.0.s8 %v1469
        %v1471 = vlaneseq
        %v1472 = vshrl.u32 %v1471, 7
        %v1473 = vsub.s32 %v1470, %v1472
        %v1474 = vrot.slane %v1464, %v1473
        %v1476 = vunpack.c.l.s4 1966171168
        %v1477 = vunpack.c.0.s8 %v1476
        %v1478 = vlaneseq
        %v1479 = vshrl.u32 %v1478, 7
        %v1480 = vsub.s32 %v1477, %v1479
        %v1481 = vrot.slane %v1465, %v1480
        %v1482 = vpack.c.bf16 %v1481, %v1474
        %v1483 = vunpack.c.l.bf16 %v1482
        %v1484 = vunpack.c.h.bf16 %v1482
        %v1485 = vsub.f32 %v1474, %v1483
        %v1486 = vsub.f32 %v1481, %v1484
        %v1487 = vpack.c.bf16 %v1486, %v1485
        %v1488 = vld [vmem:[#allocation5] sm:$0xff]
        %v1489 = vld [vmem:[#allocation5 + $0x8] sm:$0xff]
        %v1490 = vld [vmem:[#allocation5 + $0x10] sm:$0xff]
        %v1491 = vld [vmem:[#allocation5 + $0x18] sm:$0xff]
        %v1492 = vld [vmem:[#allocation5 + $0x20] sm:$0xff]
        %v1493 = vld [vmem:[#allocation5 + $0x28] sm:$0xff]
        %v1494 = vld [vmem:[#allocation5 + $0x30] sm:$0xff]
        %v1495 = vld [vmem:[#allocation5 + $0x38] sm:$0xff]
        %v1496 = vld [vmem:[#allocation5 + $0x40] sm:$0xff]
        %v1497 = vld [vmem:[#allocation5 + $0x48] sm:$0xff]
        %v1498 = vld [vmem:[#allocation5 + $0x50] sm:$0xff]
        %v1499 = vld [vmem:[#allocation5 + $0x58] sm:$0xff]
        %v1500 = vld [vmem:[#allocation5 + $0x60] sm:$0xff]
        %v1501 = vld [vmem:[#allocation5 + $0x68] sm:$0xff]
        %v1502 = vld [vmem:[#allocation5 + $0x70] sm:$0xff]
        %v1503 = vld [vmem:[#allocation5 + $0x78] sm:$0xff]
        %v1520 = vunpack.c.l.b16 %v1488
        %v1521 = vunpack.c.h.b16 %v1488
        %v1522 = vunpack.c.l.b16 %v1489
        %v1523 = vunpack.c.h.b16 %v1489
        %v1524 = vunpack.c.l.b16 %v1490
        %v1525 = vunpack.c.h.b16 %v1490
        %v1526 = vunpack.c.l.b16 %v1491
        %v1527 = vunpack.c.h.b16 %v1491
        %v1528 = vunpack.c.l.b16 %v1492
        %v1529 = vunpack.c.h.b16 %v1492
        %v1530 = vunpack.c.l.b16 %v1493
        %v1531 = vunpack.c.h.b16 %v1493
        %v1532 = vunpack.c.l.b16 %v1494
        %v1533 = vunpack.c.h.b16 %v1494
        %v1534 = vunpack.c.l.b16 %v1495
        %v1535 = vunpack.c.h.b16 %v1495
        %v1536 = vunpack.c.l.b16 %v1496
        %v1537 = vunpack.c.h.b16 %v1496
        %v1538 = vunpack.c.l.b16 %v1497
        %v1539 = vunpack.c.h.b16 %v1497
        %v1540 = vunpack.c.l.b16 %v1498
        %v1541 = vunpack.c.h.b16 %v1498
        %v1542 = vunpack.c.l.b16 %v1499
        %v1543 = vunpack.c.h.b16 %v1499
        %v1544 = vunpack.c.l.b16 %v1500
        %v1545 = vunpack.c.h.b16 %v1500
        %v1546 = vunpack.c.l.b16 %v1501
        %v1547 = vunpack.c.h.b16 %v1501
        %v1548 = vunpack.c.l.b16 %v1502
        %v1549 = vunpack.c.h.b16 %v1502
        %v1550 = vunpack.c.l.b16 %v1503
        %v1551 = vunpack.c.h.b16 %v1503
        %v1552 = vpack.c.b16 %v1522, %v1520
        %v1553 = vpack.c.b16 %v1523, %v1521
        %v1554 = vpack.c.b16 %v1526, %v1524
        %v1555 = vpack.c.b16 %v1527, %v1525
        %v1556 = vpack.c.b16 %v1530, %v1528
        %v1557 = vpack.c.b16 %v1531, %v1529
        %v1558 = vpack.c.b16 %v1534, %v1532
        %v1559 = vpack.c.b16 %v1535, %v1533
        %v1560 = vpack.c.b16 %v1538, %v1536
        %v1561 = vpack.c.b16 %v1539, %v1537
        %v1562 = vpack.c.b16 %v1542, %v1540
        %v1563 = vpack.c.b16 %v1543, %v1541
        %v1564 = vpack.c.b16 %v1546, %v1544
        %v1565 = vpack.c.b16 %v1547, %v1545
        %v1566 = vpack.c.b16 %v1550, %v1548
        %v1567 = vpack.c.b16 %v1551, %v1549
        %1584 = vmatprep.subr.bf16.mxu0 %v1553
        %1585 = vmatpush1.bf16.msra.mxu0 %v1552
        %1586 = vmatprep.subr.bf16.mxu0 %v1555
        %1587 = vmatpush1.bf16.msra.mxu0 %v1554
        %1588 = vmatprep.subr.bf16.mxu0 %v1557
        %1589 = vmatpush1.bf16.msra.mxu0 %v1556
        %1590 = vmatprep.subr.bf16.mxu0 %v1559
        %1591 = vmatpush1.bf16.msra.mxu0 %v1558
        %1592 = vmatprep.subr.bf16.mxu0 %v1561
        %1593 = vmatpush1.bf16.msra.mxu0 %v1560
        %1594 = vmatprep.subr.bf16.mxu0 %v1563
        %1595 = vmatpush1.bf16.msra.mxu0 %v1562
        %1596 = vmatprep.subr.bf16.mxu0 %v1565
        %1597 = vmatpush1.bf16.msra.mxu0 %v1564
        %1598 = vmatprep.subr.bf16.mxu0 %v1567
        %1599 = vmatpush1.bf16.msra.mxu0 %v1566
        %1600 = vmatprep.subr.bf16.mxu0 0
        %1601 = vmatpush1.bf16.msra.mxu0 0
        %1602 = vmatprep.subr.bf16.mxu0 0
        %1603 = vmatpush1.bf16.msra.mxu0 0
        %1604 = vmatprep.subr.bf16.mxu0 0
        %1605 = vmatpush1.bf16.msra.mxu0 0
        %1606 = vmatprep.subr.bf16.mxu0 0
        %1607 = vmatpush1.bf16.msra.mxu0 0
        %1608 = vmatprep.subr.bf16.mxu0 0
        %1609 = vmatpush1.bf16.msra.mxu0 0
        %1610 = vmatprep.subr.bf16.mxu0 0
        %1611 = vmatpush1.bf16.msra.mxu0 0
        %1612 = vmatprep.subr.bf16.mxu0 0
        %1613 = vmatpush1.bf16.msra.mxu0 0
        %1614 = vmatprep.subr.bf16.mxu0 0
        %1615 = vmatpush1.bf16.msra.mxu0 0
        %1616 = vmatprep.mubr.bf16.mxu0 0
        %1617 = vmatmul.mubr.bf16.gmra.mrb[0].mxu0 %v1487
        %v1618 = vpop.f32.mrb[0].mxu0
        %v1619 = vadd.f32 0.0, %v1618
        %v1620 = vpop.f32.mrb[0].mxu0
        %v1621 = vadd.f32 0.0, %v1620
        %v1622 = vpop.f32.mrb[0].mxu0
        %v1623 = vadd.f32 0.0, %v1622
        %v1624 = vpop.f32.mrb[0].mxu0
        %v1625 = vadd.f32 0.0, %v1624
        %1626 = vdwg.mxu0
        %1627 = vmatprep.subr.bf16.mxu0 %v1553
        %1628 = vmatpush1.bf16.msra.mxu0 %v1552
        %1629 = vmatprep.subr.bf16.mxu0 %v1555
        %1630 = vmatpush1.bf16.msra.mxu0 %v1554
        %1631 = vmatprep.subr.bf16.mxu0 %v1557
        %1632 = vmatpush1.bf16.msra.mxu0 %v1556
        %1633 = vmatprep.subr.bf16.mxu0 %v1559
        %1634 = vmatpush1.bf16.msra.mxu0 %v1558
        %1635 = vmatprep.subr.bf16.mxu0 %v1561
        %1636 = vmatpush1.bf16.msra.mxu0 %v1560
        %1637 = vmatprep.subr.bf16.mxu0 %v1563
        %1638 = vmatpush1.bf16.msra.mxu0 %v1562
        %1639 = vmatprep.subr.bf16.mxu0 %v1565
        %1640 = vmatpush1.bf16.msra.mxu0 %v1564
        %1641 = vmatprep.subr.bf16.mxu0 %v1567
        %1642 = vmatpush1.bf16.msra.mxu0 %v1566
        %1643 = vmatprep.subr.bf16.mxu0 0
        %1644 = vmatpush1.bf16.msra.mxu0 0
        %1645 = vmatprep.subr.bf16.mxu0 0
        %1646 = vmatpush1.bf16.msra.mxu0 0
        %1647 = vmatprep.subr.bf16.mxu0 0
        %1648 = vmatpush1.bf16.msra.mxu0 0
        %1649 = vmatprep.subr.bf16.mxu0 0
        %1650 = vmatpush1.bf16.msra.mxu0 0
        %1651 = vmatprep.subr.bf16.mxu0 0
        %1652 = vmatpush1.bf16.msra.mxu0 0
        %1653 = vmatprep.subr.bf16.mxu0 0
        %1654 = vmatpush1.bf16.msra.mxu0 0
        %1655 = vmatprep.subr.bf16.mxu0 0
        %1656 = vmatpush1.bf16.msra.mxu0 0
        %1657 = vmatprep.subr.bf16.mxu0 0
        %1658 = vmatpush1.bf16.msra.mxu0 0
        %1659 = vmatprep.mubr.bf16.mxu0 0
        %1660 = vmatmul.mubr.bf16.gmra.mrb[0].mxu0 %v1482
        %v1661 = vpop.f32.mrb[0].mxu0
        %v1662 = vadd.f32 %v1619, %v1661
        %v1663 = vpop.f32.mrb[0].mxu0
        %v1664 = vadd.f32 %v1621, %v1663
        %v1665 = vpop.f32.mrb[0].mxu0
        %v1666 = vadd.f32 %v1623, %v1665
        %v1667 = vpop.f32.mrb[0].mxu0
        %v1668 = vadd.f32 %v1625, %v1667
        %1669 = vdwg.mxu0
        %v1670 = vcombine.high %v919, %v921
        %v1671 = vcombine.high %v1433, %v1435
        %v1673 = vunpack.c.l.s4 1983009808
        %v1674 = vunpack.c.0.s8 %v1673
        %v1675 = vlaneseq
        %v1676 = vshrl.u32 %v1675, 7
        %v1677 = vsub.s32 %v1674, %v1676
        %v1678 = vrot.slane %v1670, %v1677
        %v1680 = vunpack.c.l.s4 1983009808
        %v1681 = vunpack.c.0.s8 %v1680
        %v1682 = vlaneseq
        %v1683 = vshrl.u32 %v1682, 7
        %v1684 = vsub.s32 %v1681, %v1683
        %v1685 = vrot.slane %v1671, %v1684
        %v1686 = vcombine.low %v1678, %v1685
        %v1687 = vcombine.high %v1678, %v1685
        %v1691 = vunpack.c.l.s4 1966171168
        %v1692 = vunpack.c.0.s8 %v1691
        %v1693 = vlaneseq
        %v1694 = vshrl.u32 %v1693, 7
        %v1695 = vsub.s32 %v1692, %v1694
        %v1696 = vrot.slane %v1686, %v1695
        %v1698 = vunpack.c.l.s4 1966171168
        %v1699 = vunpack.c.0.s8 %v1698
        %v1700 = vlaneseq
        %v1701 = vshrl.u32 %v1700, 7
        %v1702 = vsub.s32 %v1699, %v1701
        %v1703 = vrot.slane %v1687, %v1702
        %v1704 = vpack.c.bf16 %v1703, %v1696
        %v1705 = vunpack.c.l.bf16 %v1704
        %v1706 = vunpack.c.h.bf16 %v1704
        %v1707 = vsub.f32 %v1696, %v1705
        %v1708 = vsub.f32 %v1703, %v1706
        %v1709 = vpack.c.bf16 %v1708, %v1707
        %s1710 = scalar_lea.vmem [#allocation5], 128
        %v1711 = vld [vmem:[%s1710] sm:$0xff]
        %v1712 = vld [vmem:[%s1710 + $0x8] sm:$0xff]
        %v1713 = vld [vmem:[%s1710 + $0x10] sm:$0xff]
        %v1714 = vld [vmem:[%s1710 + $0x18] sm:$0xff]
        %v1715 = vld [vmem:[%s1710 + $0x20] sm:$0xff]
        %v1716 = vld [vmem:[%s1710 + $0x28] sm:$0xff]
        %v1717 = vld [vmem:[%s1710 + $0x30] sm:$0xff]
        %v1718 = vld [vmem:[%s1710 + $0x38] sm:$0xff]
        %v1719 = vld [vmem:[%s1710 + $0x40] sm:$0xff]
        %v1720 = vld [vmem:[%s1710 + $0x48] sm:$0xff]
        %v1721 = vld [vmem:[%s1710 + $0x50] sm:$0xff]
        %v1722 = vld [vmem:[%s1710 + $0x58] sm:$0xff]
        %v1723 = vld [vmem:[%s1710 + $0x60] sm:$0xff]
        %v1724 = vld [vmem:[%s1710 + $0x68] sm:$0xff]
        %v1725 = vld [vmem:[%s1710 + $0x70] sm:$0xff]
        %v1726 = vld [vmem:[%s1710 + $0x78] sm:$0xff]
        %v1743 = vunpack.c.l.b16 %v1711
        %v1744 = vunpack.c.h.b16 %v1711
        %v1745 = vunpack.c.l.b16 %v1712
        %v1746 = vunpack.c.h.b16 %v1712
        %v1747 = vunpack.c.l.b16 %v1713
        %v1748 = vunpack.c.h.b16 %v1713
        %v1749 = vunpack.c.l.b16 %v1714
        %v1750 = vunpack.c.h.b16 %v1714
        %v1751 = vunpack.c.l.b16 %v1715
        %v1752 = vunpack.c.h.b16 %v1715
        %v1753 = vunpack.c.l.b16 %v1716
        %v1754 = vunpack.c.h.b16 %v1716
        %v1755 = vunpack.c.l.b16 %v1717
        %v1756 = vunpack.c.h.b16 %v1717
        %v1757 = vunpack.c.l.b16 %v1718
        %v1758 = vunpack.c.h.b16 %v1718
        %v1759 = vunpack.c.l.b16 %v1719
        %v1760 = vunpack.c.h.b16 %v1719
        %v1761 = vunpack.c.l.b16 %v1720
        %v1762 = vunpack.c.h.b16 %v1720
        %v1763 = vunpack.c.l.b16 %v1721
        %v1764 = vunpack.c.h.b16 %v1721
        %v1765 = vunpack.c.l.b16 %v1722
        %v1766 = vunpack.c.h.b16 %v1722
        %v1767 = vunpack.c.l.b16 %v1723
        %v1768 = vunpack.c.h.b16 %v1723
        %v1769 = vunpack.c.l.b16 %v1724
        %v1770 = vunpack.c.h.b16 %v1724
        %v1771 = vunpack.c.l.b16 %v1725
        %v1772 = vunpack.c.h.b16 %v1725
        %v1773 = vunpack.c.l.b16 %v1726
        %v1774 = vunpack.c.h.b16 %v1726
        %v1775 = vpack.c.b16 %v1745, %v1743
        %v1776 = vpack.c.b16 %v1746, %v1744
        %v1777 = vpack.c.b16 %v1749, %v1747
        %v1778 = vpack.c.b16 %v1750, %v1748
        %v1779 = vpack.c.b16 %v1753, %v1751
        %v1780 = vpack.c.b16 %v1754, %v1752
        %v1781 = vpack.c.b16 %v1757, %v1755
        %v1782 = vpack.c.b16 %v1758, %v1756
        %v1783 = vpack.c.b16 %v1761, %v1759
        %v1784 = vpack.c.b16 %v1762, %v1760
        %v1785 = vpack.c.b16 %v1765, %v1763
        %v1786 = vpack.c.b16 %v1766, %v1764
        %v1787 = vpack.c.b16 %v1769, %v1767
        %v1788 = vpack.c.b16 %v1770, %v1768
        %v1789 = vpack.c.b16 %v1773, %v1771
        %v1790 = vpack.c.b16 %v1774, %v1772
        %1807 = vmatprep.subr.bf16.mxu0 %v1776
        %1808 = vmatpush1.bf16.msra.mxu0 %v1775
        %1809 = vmatprep.subr.bf16.mxu0 %v1778
        %1810 = vmatpush1.bf16.msra.mxu0 %v1777
        %1811 = vmatprep.subr.bf16.mxu0 %v1780
        %1812 = vmatpush1.bf16.msra.mxu0 %v1779
        %1813 = vmatprep.subr.bf16.mxu0 %v1782
        %1814 = vmatpush1.bf16.msra.mxu0 %v1781
        %1815 = vmatprep.subr.bf16.mxu0 %v1784
        %1816 = vmatpush1.bf16.msra.mxu0 %v1783
        %1817 = vmatprep.subr.bf16.mxu0 %v1786
        %1818 = vmatpush1.bf16.msra.mxu0 %v1785
        %1819 = vmatprep.subr.bf16.mxu0 %v1788
        %1820 = vmatpush1.bf16.msra.mxu0 %v1787
        %1821 = vmatprep.subr.bf16.mxu0 %v1790
        %1822 = vmatpush1.bf16.msra.mxu0 %v1789
        %1823 = vmatprep.subr.bf16.mxu0 0
        %1824 = vmatpush1.bf16.msra.mxu0 0
        %1825 = vmatprep.subr.bf16.mxu0 0
        %1826 = vmatpush1.bf16.msra.mxu0 0
        %1827 = vmatprep.subr.bf16.mxu0 0
        %1828 = vmatpush1.bf16.msra.mxu0 0
        %1829 = vmatprep.subr.bf16.mxu0 0
        %1830 = vmatpush1.bf16.msra.mxu0 0
        %1831 = vmatprep.subr.bf16.mxu0 0
        %1832 = vmatpush1.bf16.msra.mxu0 0
        %1833 = vmatprep.subr.bf16.mxu0 0
        %1834 = vmatpush1.bf16.msra.mxu0 0
        %1835 = vmatprep.subr.bf16.mxu0 0
        %1836 = vmatpush1.bf16.msra.mxu0 0
        %1837 = vmatprep.subr.bf16.mxu0 0
        %1838 = vmatpush1.bf16.msra.mxu0 0
        %1839 = vmatprep.mubr.bf16.mxu0 0
        %1840 = vmatmul.mubr.bf16.gmra.mrb[0].mxu0 %v1709
        %v1841 = vpop.f32.mrb[0].mxu0
        %v1842 = vadd.f32 0.0, %v1841
        %v1843 = vpop.f32.mrb[0].mxu0
        %v1844 = vadd.f32 0.0, %v1843
        %v1845 = vpop.f32.mrb[0].mxu0
        %v1846 = vadd.f32 0.0, %v1845
        %v1847 = vpop.f32.mrb[0].mxu0
        %v1848 = vadd.f32 0.0, %v1847
        %1849 = vdwg.mxu0
        %1850 = vmatprep.subr.bf16.mxu0 %v1776
        %1851 = vmatpush1.bf16.msra.mxu0 %v1775
        %1852 = vmatprep.subr.bf16.mxu0 %v1778
        %1853 = vmatpush1.bf16.msra.mxu0 %v1777
        %1854 = vmatprep.subr.bf16.mxu0 %v1780
        %1855 = vmatpush1.bf16.msra.mxu0 %v1779
        %1856 = vmatprep.subr.bf16.mxu0 %v1782
        %1857 = vmatpush1.bf16.msra.mxu0 %v1781
        %1858 = vmatprep.subr.bf16.mxu0 %v1784
        %1859 = vmatpush1.bf16.msra.mxu0 %v1783
        %1860 = vmatprep.subr.bf16.mxu0 %v1786
        %1861 = vmatpush1.bf16.msra.mxu0 %v1785
        %1862 = vmatprep.subr.bf16.mxu0 %v1788
        %1863 = vmatpush1.bf16.msra.mxu0 %v1787
        %1864 = vmatprep.subr.bf16.mxu0 %v1790
        %1865 = vmatpush1.bf16.msra.mxu0 %v1789
        %1866 = vmatprep.subr.bf16.mxu0 0
        %1867 = vmatpush1.bf16.msra.mxu0 0
        %1868 = vmatprep.subr.bf16.mxu0 0
        %1869 = vmatpush1.bf16.msra.mxu0 0
        %1870 = vmatprep.subr.bf16.mxu0 0
        %1871 = vmatpush1.bf16.msra.mxu0 0
        %1872 = vmatprep.subr.bf16.mxu0 0
        %1873 = vmatpush1.bf16.msra.mxu0 0
        %1874 = vmatprep.subr.bf16.mxu0 0
        %1875 = vmatpush1.bf16.msra.mxu0 0
        %1876 = vmatprep.subr.bf16.mxu0 0
        %1877 = vmatpush1.bf16.msra.mxu0 0
        %1878 = vmatprep.subr.bf16.mxu0 0
        %1879 = vmatpush1.bf16.msra.mxu0 0
        %1880 = vmatprep.subr.bf16.mxu0 0
        %1881 = vmatpush1.bf16.msra.mxu0 0
        %1882 = vmatprep.mubr.bf16.mxu0 0
        %1883 = vmatmul.mubr.bf16.gmra.mrb[0].mxu0 %v1704
        %v1884 = vpop.f32.mrb[0].mxu0
        %v1885 = vadd.f32 %v1842, %v1884
        %v1886 = vpop.f32.mrb[0].mxu0
        %v1887 = vadd.f32 %v1844, %v1886
        %v1888 = vpop.f32.mrb[0].mxu0
        %v1889 = vadd.f32 %v1846, %v1888
        %v1890 = vpop.f32.mrb[0].mxu0
        %v1891 = vadd.f32 %v1848, %v1890
        %1892 = vdwg.mxu0
        %v1893 = vadd.f32 %v1662, %v1885
        %v1894 = vadd.f32 %v1664, %v1887
        %v1895 = vadd.f32 %v1666, %v1889
        %v1896 = vadd.f32 %v1668, %v1891
        %v1901 = vcombine.low %v926, %v928
        %v1902 = vcombine.low %v1440, %v1442
        %v1904 = vunpack.c.l.s4 1983009808
        %v1905 = vunpack.c.0.s8 %v1904
        %v1906 = vlaneseq
        %v1907 = vshrl.u32 %v1906, 7
        %v1908 = vsub.s32 %v1905, %v1907
        %v1909 = vrot.slane %v1901, %v1908
        %v1911 = vunpack.c.l.s4 1983009808
        %v1912 = vunpack.c.0.s8 %v1911
        %v1913 = vlaneseq
        %v1914 = vshrl.u32 %v1913, 7
        %v1915 = vsub.s32 %v1912, %v1914
        %v1916 = vrot.slane %v1902, %v1915
        %v1917 = vcombine.low %v1909, %v1916
        %v1918 = vcombine.high %v1909, %v1916
        %v1922 = vunpack.c.l.s4 1966171168
        %v1923 = vunpack.c.0.s8 %v1922
        %v1924 = vlaneseq
        %v1925 = vshrl.u32 %v1924, 7
        %v1926 = vsub.s32 %v1923, %v1925
        %v1927 = vrot.slane %v1917, %v1926
        %v1929 = vunpack.c.l.s4 1966171168
        %v1930 = vunpack.c.0.s8 %v1929
        %v1931 = vlaneseq
        %v1932 = vshrl.u32 %v1931, 7
        %v1933 = vsub.s32 %v1930, %v1932
        %v1934 = vrot.slane %v1918, %v1933
        %v1935 = vpack.c.bf16 %v1934, %v1927
        %v1936 = vunpack.c.l.bf16 %v1935
        %v1937 = vunpack.c.h.bf16 %v1935
        %v1938 = vsub.f32 %v1927, %v1936
        %v1939 = vsub.f32 %v1934, %v1937
        %v1940 = vpack.c.bf16 %v1939, %v1938
        %1941 = vmatprep.subr.bf16.mxu0 %v1553
        %1942 = vmatpush1.bf16.msra.mxu0 %v1552
        %1943 = vmatprep.subr.bf16.mxu0 %v1555
        %1944 = vmatpush1.bf16.msra.mxu0 %v1554
        %1945 = vmatprep.subr.bf16.mxu0 %v1557
        %1946 = vmatpush1.bf16.msra.mxu0 %v1556
        %1947 = vmatprep.subr.bf16.mxu0 %v1559
        %1948 = vmatpush1.bf16.msra.mxu0 %v1558
        %1949 = vmatprep.subr.bf16.mxu0 %v1561
        %1950 = vmatpush1.bf16.msra.mxu0 %v1560
        %1951 = vmatprep.subr.bf16.mxu0 %v1563
        %1952 = vmatpush1.bf16.msra.mxu0 %v1562
        %1953 = vmatprep.subr.bf16.mxu0 %v1565
        %1954 = vmatpush1.bf16.msra.mxu0 %v1564
        %1955 = vmatprep.subr.bf16.mxu0 %v1567
        %1956 = vmatpush1.bf16.msra.mxu0 %v1566
        %1957 = vmatprep.subr.bf16.mxu0 0
        %1958 = vmatpush1.bf16.msra.mxu0 0
        %1959 = vmatprep.subr.bf16.mxu0 0
        %1960 = vmatpush1.bf16.msra.mxu0 0
        %1961 = vmatprep.subr.bf16.mxu0 0
        %1962 = vmatpush1.bf16.msra.mxu0 0
        %1963 = vmatprep.subr.bf16.mxu0 0
        %1964 = vmatpush1.bf16.msra.mxu0 0
        %1965 = vmatprep.subr.bf16.mxu0 0
        %1966 = vmatpush1.bf16.msra.mxu0 0
        %1967 = vmatprep.subr.bf16.mxu0 0
        %1968 = vmatpush1.bf16.msra.mxu0 0
        %1969 = vmatprep.subr.bf16.mxu0 0
        %1970 = vmatpush1.bf16.msra.mxu0 0
        %1971 = vmatprep.subr.bf16.mxu0 0
        %1972 = vmatpush1.bf16.msra.mxu0 0
        %1973 = vmatprep.mubr.bf16.mxu0 0
        %1974 = vmatmul.mubr.bf16.gmra.mrb[0].mxu0 %v1940
        %v1975 = vpop.f32.mrb[0].mxu0
        %v1976 = vadd.f32 0.0, %v1975
        %v1977 = vpop.f32.mrb[0].mxu0
        %v1978 = vadd.f32 0.0, %v1977
        %v1979 = vpop.f32.mrb[0].mxu0
        %v1980 = vadd.f32 0.0, %v1979
        %v1981 = vpop.f32.mrb[0].mxu0
        %v1982 = vadd.f32 0.0, %v1981
        %1983 = vdwg.mxu0
        %1984 = vmatprep.subr.bf16.mxu0 %v1553
        %1985 = vmatpush1.bf16.msra.mxu0 %v1552
        %1986 = vmatprep.subr.bf16.mxu0 %v1555
        %1987 = vmatpush1.bf16.msra.mxu0 %v1554
        %1988 = vmatprep.subr.bf16.mxu0 %v1557
        %1989 = vmatpush1.bf16.msra.mxu0 %v1556
        %1990 = vmatprep.subr.bf16.mxu0 %v1559
        %1991 = vmatpush1.bf16.msra.mxu0 %v1558
        %1992 = vmatprep.subr.bf16.mxu0 %v1561
        %1993 = vmatpush1.bf16.msra.mxu0 %v1560
        %1994 = vmatprep.subr.bf16.mxu0 %v1563
        %1995 = vmatpush1.bf16.msra.mxu0 %v1562
        %1996 = vmatprep.subr.bf16.mxu0 %v1565
        %1997 = vmatpush1.bf16.msra.mxu0 %v1564
        %1998 = vmatprep.subr.bf16.mxu0 %v1567
        %1999 = vmatpush1.bf16.msra.mxu0 %v1566
        %2000 = vmatprep.subr.bf16.mxu0 0
        %2001 = vmatpush1.bf16.msra.mxu0 0
        %2002 = vmatprep.subr.bf16.mxu0 0
        %2003 = vmatpush1.bf16.msra.mxu0 0
        %2004 = vmatprep.subr.bf16.mxu0 0
        %2005 = vmatpush1.bf16.msra.mxu0 0
        %2006 = vmatprep.subr.bf16.mxu0 0
        %2007 = vmatpush1.bf16.msra.mxu0 0
        %2008 = vmatprep.subr.bf16.mxu0 0
        %2009 = vmatpush1.bf16.msra.mxu0 0
        %2010 = vmatprep.subr.bf16.mxu0 0
        %2011 = vmatpush1.bf16.msra.mxu0 0
        %2012 = vmatprep.subr.bf16.mxu0 0
        %2013 = vmatpush1.bf16.msra.mxu0 0
        %2014 = vmatprep.subr.bf16.mxu0 0
        %2015 = vmatpush1.bf16.msra.mxu0 0
        %2016 = vmatprep.mubr.bf16.mxu0 0
        %2017 = vmatmul.mubr.bf16.gmra.mrb[0].mxu0 %v1935
        %v2018 = vpop.f32.mrb[0].mxu0
        %v2019 = vadd.f32 %v1976, %v2018
        %v2020 = vpop.f32.mrb[0].mxu0
        %v2021 = vadd.f32 %v1978, %v2020
        %v2022 = vpop.f32.mrb[0].mxu0
        %v2023 = vadd.f32 %v1980, %v2022
        %v2024 = vpop.f32.mrb[0].mxu0
        %v2025 = vadd.f32 %v1982, %v2024
        %2026 = vdwg.mxu0
        %v2027 = vcombine.high %v926, %v928
        %v2028 = vcombine.high %v1440, %v1442
        %v2030 = vunpack.c.l.s4 1983009808
        %v2031 = vunpack.c.0.s8 %v2030
        %v2032 = vlaneseq
        %v2033 = vshrl.u32 %v2032, 7
        %v2034 = vsub.s32 %v2031, %v2033
        %v2035 = vrot.slane %v2027, %v2034
        %v2037 = vunpack.c.l.s4 1983009808
        %v2038 = vunpack.c.0.s8 %v2037
        %v2039 = vlaneseq
        %v2040 = vshrl.u32 %v2039, 7
        %v2041 = vsub.s32 %v2038, %v2040
        %v2042 = vrot.slane %v2028, %v2041
        %v2043 = vcombine.low %v2035, %v2042
        %v2044 = vcombine.high %v2035, %v2042
        %v2048 = vunpack.c.l.s4 1966171168
        %v2049 = vunpack.c.0.s8 %v2048
        %v2050 = vlaneseq
        %v2051 = vshrl.u32 %v2050, 7
        %v2052 = vsub.s32 %v2049, %v2051
        %v2053 = vrot.slane %v2043, %v2052
        %v2055 = vunpack.c.l.s4 1966171168
        %v2056 = vunpack.c.0.s8 %v2055
        %v2057 = vlaneseq
        %v2058 = vshrl.u32 %v2057, 7
        %v2059 = vsub.s32 %v2056, %v2058
        %v2060 = vrot.slane %v2044, %v2059
        %v2061 = vpack.c.bf16 %v2060, %v2053
        %v2062 = vunpack.c.l.bf16 %v2061
        %v2063 = vunpack.c.h.bf16 %v2061
        %v2064 = vsub.f32 %v2053, %v2062
        %v2065 = vsub.f32 %v2060, %v2063
        %v2066 = vpack.c.bf16 %v2065, %v2064
        %2067 = vmatprep.subr.bf16.mxu0 %v1776
        %2068 = vmatpush1.bf16.msra.mxu0 %v1775
        %2069 = vmatprep.subr.bf16.mxu0 %v1778
        %2070 = vmatpush1.bf16.msra.mxu0 %v1777
        %2071 = vmatprep.subr.bf16.mxu0 %v1780
        %2072 = vmatpush1.bf16.msra.mxu0 %v1779
        %2073 = vmatprep.subr.bf16.mxu0 %v1782
        %2074 = vmatpush1.bf16.msra.mxu0 %v1781
        %2075 = vmatprep.subr.bf16.mxu0 %v1784
        %2076 = vmatpush1.bf16.msra.mxu0 %v1783
        %2077 = vmatprep.subr.bf16.mxu0 %v1786
        %2078 = vmatpush1.bf16.msra.mxu0 %v1785
        %2079 = vmatprep.subr.bf16.mxu0 %v1788
        %2080 = vmatpush1.bf16.msra.mxu0 %v1787
        %2081 = vmatprep.subr.bf16.mxu0 %v1790
        %2082 = vmatpush1.bf16.msra.mxu0 %v1789
        %2083 = vmatprep.subr.bf16.mxu0 0
        %2084 = vmatpush1.bf16.msra.mxu0 0
        %2085 = vmatprep.subr.bf16.mxu0 0
        %2086 = vmatpush1.bf16.msra.mxu0 0
        %2087 = vmatprep.subr.bf16.mxu0 0
        %2088 = vmatpush1.bf16.msra.mxu0 0
        %2089 = vmatprep.subr.bf16.mxu0 0
        %2090 = vmatpush1.bf16.msra.mxu0 0
        %2091 = vmatprep.subr.bf16.mxu0 0
        %2092 = vmatpush1.bf16.msra.mxu0 0
        %2093 = vmatprep.subr.bf16.mxu0 0
        %2094 = vmatpush1.bf16.msra.mxu0 0
        %2095 = vmatprep.subr.bf16.mxu0 0
        %2096 = vmatpush1.bf16.msra.mxu0 0
        %2097 = vmatprep.subr.bf16.mxu0 0
        %2098 = vmatpush1.bf16.msra.mxu0 0
        %2099 = vmatprep.mubr.bf16.mxu0 0
        %2100 = vmatmul.mubr.bf16.gmra.mrb[0].mxu0 %v2066
        %v2101 = vpop.f32.mrb[0].mxu0
        %v2102 = vadd.f32 0.0, %v2101
        %v2103 = vpop.f32.mrb[0].mxu0
        %v2104 = vadd.f32 0.0, %v2103
        %v2105 = vpop.f32.mrb[0].mxu0
        %v2106 = vadd.f32 0.0, %v2105
        %v2107 = vpop.f32.mrb[0].mxu0
        %v2108 = vadd.f32 0.0, %v2107
        %2109 = vdwg.mxu0
        %2110 = vmatprep.subr.bf16.mxu0 %v1776
        %2111 = vmatpush1.bf16.msra.mxu0 %v1775
        %2112 = vmatprep.subr.bf16.mxu0 %v1778
        %2113 = vmatpush1.bf16.msra.mxu0 %v1777
        %2114 = vmatprep.subr.bf16.mxu0 %v1780
        %2115 = vmatpush1.bf16.msra.mxu0 %v1779
        %2116 = vmatprep.subr.bf16.mxu0 %v1782
        %2117 = vmatpush1.bf16.msra.mxu0 %v1781
        %2118 = vmatprep.subr.bf16.mxu0 %v1784
        %2119 = vmatpush1.bf16.msra.mxu0 %v1783
        %2120 = vmatprep.subr.bf16.mxu0 %v1786
        %2121 = vmatpush1.bf16.msra.mxu0 %v1785
        %2122 = vmatprep.subr.bf16.mxu0 %v1788
        %2123 = vmatpush1.bf16.msra.mxu0 %v1787
        %2124 = vmatprep.subr.bf16.mxu0 %v1790
        %2125 = vmatpush1.bf16.msra.mxu0 %v1789
        %2126 = vmatprep.subr.bf16.mxu0 0
        %2127 = vmatpush1.bf16.msra.mxu0 0
        %2128 = vmatprep.subr.bf16.mxu0 0
        %2129 = vmatpush1.bf16.msra.mxu0 0
        %2130 = vmatprep.subr.bf16.mxu0 0
        %2131 = vmatpush1.bf16.msra.mxu0 0
        %2132 = vmatprep.subr.bf16.mxu0 0
        %2133 = vmatpush1.bf16.msra.mxu0 0
        %2134 = vmatprep.subr.bf16.mxu0 0
        %2135 = vmatpush1.bf16.msra.mxu0 0
        %2136 = vmatprep.subr.bf16.mxu0 0
        %2137 = vmatpush1.bf16.msra.mxu0 0
        %2138 = vmatprep.subr.bf16.mxu0 0
        %2139 = vmatpush1.bf16.msra.mxu0 0
        %2140 = vmatprep.subr.bf16.mxu0 0
        %2141 = vmatpush1.bf16.msra.mxu0 0
        %2142 = vmatprep.mubr.bf16.mxu0 0
        %2143 = vmatmul.mubr.bf16.gmra.mrb[0].mxu0 %v2061
        %v2144 = vpop.f32.mrb[0].mxu0
        %v2145 = vadd.f32 %v2102, %v2144
        %v2146 = vpop.f32.mrb[0].mxu0
        %v2147 = vadd.f32 %v2104, %v2146
        %v2148 = vpop.f32.mrb[0].mxu0
        %v2149 = vadd.f32 %v2106, %v2148
        %v2150 = vpop.f32.mrb[0].mxu0
        %v2151 = vadd.f32 %v2108, %v2150
        %2152 = vdwg.mxu0
        %v2153 = vadd.f32 %v2019, %v2145
        %v2154 = vadd.f32 %v2021, %v2147
        %v2155 = vadd.f32 %v2023, %v2149
        %v2156 = vadd.f32 %v2025, %v2151
        %v2165 = vcombine.low %v1893, %v1894
        %v2166 = vcombine.high %v1893, %v1894
        %v2167 = vcombine.low %v2153, %v2154
        %v2168 = vcombine.high %v2153, %v2154
        %v2170 = vunpack.c.l.s4 1983009808
        %v2171 = vunpack.c.0.s8 %v2170
        %v2172 = vlaneseq
        %v2173 = vshrl.u32 %v2172, 7
        %v2174 = vsub.s32 %v2171, %v2173
        %v2175 = vrot.slane %v2165, %v2174
        %v2177 = vunpack.c.l.s4 1983009808
        %v2178 = vunpack.c.0.s8 %v2177
        %v2179 = vlaneseq
        %v2180 = vshrl.u32 %v2179, 7
        %v2181 = vsub.s32 %v2178, %v2180
        %v2182 = vrot.slane %v2166, %v2181
        %v2184 = vunpack.c.l.s4 1983009808
        %v2185 = vunpack.c.0.s8 %v2184
        %v2186 = vlaneseq
        %v2187 = vshrl.u32 %v2186, 7
        %v2188 = vsub.s32 %v2185, %v2187
        %v2189 = vrot.slane %v2167, %v2188
        %v2191 = vunpack.c.l.s4 1983009808
        %v2192 = vunpack.c.0.s8 %v2191
        %v2193 = vlaneseq
        %v2194 = vshrl.u32 %v2193, 7
        %v2195 = vsub.s32 %v2192, %v2194
        %v2196 = vrot.slane %v2168, %v2195
        %v2197 = vcombine.low %v2175, %v2189
        %v2198 = vcombine.high %v2175, %v2189
        %v2199 = vcombine.low %v2182, %v2196
        %v2200 = vcombine.high %v2182, %v2196
        %v2201 = vcombine.low %v1895, %v1896
        %v2202 = vcombine.high %v1895, %v1896
        %v2203 = vcombine.low %v2155, %v2156
        %v2204 = vcombine.high %v2155, %v2156
        %v2206 = vunpack.c.l.s4 1983009808
        %v2207 = vunpack.c.0.s8 %v2206
        %v2208 = vlaneseq
        %v2209 = vshrl.u32 %v2208, 7
        %v2210 = vsub.s32 %v2207, %v2209
        %v2211 = vrot.slane %v2201, %v2210
        %v2213 = vunpack.c.l.s4 1983009808
        %v2214 = vunpack.c.0.s8 %v2213
        %v2215 = vlaneseq
        %v2216 = vshrl.u32 %v2215, 7
        %v2217 = vsub.s32 %v2214, %v2216
        %v2218 = vrot.slane %v2202, %v2217
        %v2220 = vunpack.c.l.s4 1983009808
        %v2221 = vunpack.c.0.s8 %v2220
        %v2222 = vlaneseq
        %v2223 = vshrl.u32 %v2222, 7
        %v2224 = vsub.s32 %v2221, %v2223
        %v2225 = vrot.slane %v2203, %v2224
        %v2227 = vunpack.c.l.s4 1983009808
        %v2228 = vunpack.c.0.s8 %v2227
        %v2229 = vlaneseq
        %v2230 = vshrl.u32 %v2229, 7
        %v2231 = vsub.s32 %v2228, %v2230
        %v2232 = vrot.slane %v2204, %v2231
        %v2233 = vcombine.low %v2211, %v2225
        %v2234 = vcombine.high %v2211, %v2225
        %v2235 = vcombine.low %v2218, %v2232
        %v2236 = vcombine.high %v2218, %v2232
        %v2246 = vunpack.c.l.s4 1966171168
        %v2247 = vunpack.c.0.s8 %v2246
        %v2248 = vlaneseq
        %v2249 = vshrl.u32 %v2248, 7
        %v2250 = vsub.s32 %v2247, %v2249
        %v2251 = vrot.slane %v2197, %v2250
        %v2253 = vunpack.c.l.s4 1966171168
        %v2254 = vunpack.c.0.s8 %v2253
        %v2255 = vlaneseq
        %v2256 = vshrl.u32 %v2255, 7
        %v2257 = vsub.s32 %v2254, %v2256
        %v2258 = vrot.slane %v2198, %v2257
        %v2260 = vunpack.c.l.s4 1966171168
        %v2261 = vunpack.c.0.s8 %v2260
        %v2262 = vlaneseq
        %v2263 = vshrl.u32 %v2262, 7
        %v2264 = vsub.s32 %v2261, %v2263
        %v2265 = vrot.slane %v2199, %v2264
        %v2267 = vunpack.c.l.s4 1966171168
        %v2268 = vunpack.c.0.s8 %v2267
        %v2269 = vlaneseq
        %v2270 = vshrl.u32 %v2269, 7
        %v2271 = vsub.s32 %v2268, %v2270
        %v2272 = vrot.slane %v2200, %v2271
        %v2274 = vunpack.c.l.s4 1966171168
        %v2275 = vunpack.c.0.s8 %v2274
        %v2276 = vlaneseq
        %v2277 = vshrl.u32 %v2276, 7
        %v2278 = vsub.s32 %v2275, %v2277
        %v2279 = vrot.slane %v2233, %v2278
        %v2281 = vunpack.c.l.s4 1966171168
        %v2282 = vunpack.c.0.s8 %v2281
        %v2283 = vlaneseq
        %v2284 = vshrl.u32 %v2283, 7
        %v2285 = vsub.s32 %v2282, %v2284
        %v2286 = vrot.slane %v2234, %v2285
        %v2288 = vunpack.c.l.s4 1966171168
        %v2289 = vunpack.c.0.s8 %v2288
        %v2290 = vlaneseq
        %v2291 = vshrl.u32 %v2290, 7
        %v2292 = vsub.s32 %v2289, %v2291
        %v2293 = vrot.slane %v2235, %v2292
        %v2295 = vunpack.c.l.s4 1966171168
        %v2296 = vunpack.c.0.s8 %v2295
        %v2297 = vlaneseq
        %v2298 = vshrl.u32 %v2297, 7
        %v2299 = vsub.s32 %v2296, %v2298
        %v2300 = vrot.slane %v2236, %v2299
        %v2301 = vld [vmem:[%s5] sm:$0xf]
        %2303 = vset.pattern.permute.xlu0 0
        %2304 = vperm.xlu0 %2303, %v2301
        %v2305 = vpop.permute.xlu0 %2304
        %v2306 = vlaneseq
        %v2307 = vshrl.u32 %v2306, 7
        %v2308 = vsub.s32 0, %v2307
        %v2309 = vrot.slane %v2305, %v2308
        %v2310 = vlaneseq
        %v2311 = vshrl.u32 %v2310, 7
        %v2312 = vsub.s32 1, %v2311
        %v2313 = vrot.slane %v2305, %v2312
        %v2314 = vlaneseq
        %v2315 = vshrl.u32 %v2314, 7
        %v2316 = vsub.s32 2, %v2315
        %v2317 = vrot.slane %v2305, %v2316
        %v2318 = vlaneseq
        %v2319 = vshrl.u32 %v2318, 7
        %v2320 = vsub.s32 3, %v2319
        %v2321 = vrot.slane %v2305, %v2320
        %v2326 = vadd.f32 %v2251, %v2309
        %v2327 = vadd.f32 %v2258, %v2309
        %v2328 = vadd.f32 %v2265, %v2313
        %v2329 = vadd.f32 %v2272, %v2313
        %v2330 = vadd.f32 %v2279, %v2317
        %v2331 = vadd.f32 %v2286, %v2317
        %v2332 = vadd.f32 %v2293, %v2321
        %v2333 = vadd.f32 %v2300, %v2321
        %v2334 = vld [vmem:[%s331] sm:$0xff]
        %v2335 = vld [vmem:[%s331 + $0x8] sm:$0xff]
        %v2336 = vld [vmem:[%s331 + $0x10] sm:$0xff]
        %v2337 = vld [vmem:[%s331 + $0x18] sm:$0xff]
        %v2338 = vld [vmem:[%s331 + $0x20] sm:$0xff]
        %v2339 = vld [vmem:[%s331 + $0x28] sm:$0xff]
        %v2340 = vld [vmem:[%s331 + $0x30] sm:$0xff]
        %v2341 = vld [vmem:[%s331 + $0x38] sm:$0xff]
        %v2351 = vunpack.c.l.s4 1966171168
        %v2352 = vunpack.c.0.s8 %v2351
        %v2353 = vlaneseq
        %v2354 = vshrl.u32 %v2353, 7
        %v2355 = vsub.s32 %v2352, %v2354
        %v2356 = vrot.slane %v2334, %v2355
        %v2358 = vunpack.c.l.s4 1966171168
        %v2359 = vunpack.c.0.s8 %v2358
        %v2360 = vlaneseq
        %v2361 = vshrl.u32 %v2360, 7
        %v2362 = vsub.s32 %v2359, %v2361
        %v2363 = vrot.slane %v2335, %v2362
        %v2365 = vunpack.c.l.s4 1966171168
        %v2366 = vunpack.c.0.s8 %v2365
        %v2367 = vlaneseq
        %v2368 = vshrl.u32 %v2367, 7
        %v2369 = vsub.s32 %v2366, %v2368
        %v2370 = vrot.slane %v2336, %v2369
        %v2372 = vunpack.c.l.s4 1966171168
        %v2373 = vunpack.c.0.s8 %v2372
        %v2374 = vlaneseq
        %v2375 = vshrl.u32 %v2374, 7
        %v2376 = vsub.s32 %v2373, %v2375
        %v2377 = vrot.slane %v2337, %v2376
        %v2378 = vcombine.low %v2356, %v2363
        %v2379 = vcombine.high %v2356, %v2363
        %v2380 = vcombine.low %v2370, %v2377
        %v2381 = vcombine.high %v2370, %v2377
        %v2383 = vunpack.c.l.s4 1966171168
        %v2384 = vunpack.c.0.s8 %v2383
        %v2385 = vlaneseq
        %v2386 = vshrl.u32 %v2385, 7
        %v2387 = vsub.s32 %v2384, %v2386
        %v2388 = vrot.slane %v2378, %v2387
        %v2390 = vunpack.c.l.s4 1966171168
        %v2391 = vunpack.c.0.s8 %v2390
        %v2392 = vlaneseq
        %v2393 = vshrl.u32 %v2392, 7
        %v2394 = vsub.s32 %v2391, %v2393
        %v2395 = vrot.slane %v2379, %v2394
        %v2397 = vunpack.c.l.s4 1966171168
        %v2398 = vunpack.c.0.s8 %v2397
        %v2399 = vlaneseq
        %v2400 = vshrl.u32 %v2399, 7
        %v2401 = vsub.s32 %v2398, %v2400
        %v2402 = vrot.slane %v2380, %v2401
        %v2404 = vunpack.c.l.s4 1966171168
        %v2405 = vunpack.c.0.s8 %v2404
        %v2406 = vlaneseq
        %v2407 = vshrl.u32 %v2406, 7
        %v2408 = vsub.s32 %v2405, %v2407
        %v2409 = vrot.slane %v2381, %v2408
        %v2410 = vcombine.low %v2388, %v2402
        %v2411 = vcombine.high %v2388, %v2402
        %v2412 = vcombine.low %v2395, %v2409
        %v2413 = vcombine.high %v2395, %v2409
        %v2415 = vunpack.c.l.s4 1966171168
        %v2416 = vunpack.c.0.s8 %v2415
        %v2417 = vlaneseq
        %v2418 = vshrl.u32 %v2417, 7
        %v2419 = vsub.s32 %v2416, %v2418
        %v2420 = vrot.slane %v2338, %v2419
        %v2422 = vunpack.c.l.s4 1966171168
        %v2423 = vunpack.c.0.s8 %v2422
        %v2424 = vlaneseq
        %v2425 = vshrl.u32 %v2424, 7
        %v2426 = vsub.s32 %v2423, %v2425
        %v2427 = vrot.slane %v2339, %v2426
        %v2429 = vunpack.c.l.s4 1966171168
        %v2430 = vunpack.c.0.s8 %v2429
        %v2431 = vlaneseq
        %v2432 = vshrl.u32 %v2431, 7
        %v2433 = vsub.s32 %v2430, %v2432
        %v2434 = vrot.slane %v2340, %v2433
        %v2436 = vunpack.c.l.s4 1966171168
        %v2437 = vunpack.c.0.s8 %v2436
        %v2438 = vlaneseq
        %v2439 = vshrl.u32 %v2438, 7
        %v2440 = vsub.s32 %v2437, %v2439
        %v2441 = vrot.slane %v2341, %v2440
        %v2442 = vcombine.low %v2420, %v2427
        %v2443 = vcombine.high %v2420, %v2427
        %v2444 = vcombine.low %v2434, %v2441
        %v2445 = vcombine.high %v2434, %v2441
        %v2447 = vunpack.c.l.s4 1966171168
        %v2448 = vunpack.c.0.s8 %v2447
        %v2449 = vlaneseq
        %v2450 = vshrl.u32 %v2449, 7
        %v2451 = vsub.s32 %v2448, %v2450
        %v2452 = vrot.slane %v2442, %v2451
        %v2454 = vunpack.c.l.s4 1966171168
        %v2455 = vunpack.c.0.s8 %v2454
        %v2456 = vlaneseq
        %v2457 = vshrl.u32 %v2456, 7
        %v2458 = vsub.s32 %v2455, %v2457
        %v2459 = vrot.slane %v2443, %v2458
        %v2461 = vunpack.c.l.s4 1966171168
        %v2462 = vunpack.c.0.s8 %v2461
        %v2463 = vlaneseq
        %v2464 = vshrl.u32 %v2463, 7
        %v2465 = vsub.s32 %v2462, %v2464
        %v2466 = vrot.slane %v2444, %v2465
        %v2468 = vunpack.c.l.s4 1966171168
        %v2469 = vunpack.c.0.s8 %v2468
        %v2470 = vlaneseq
        %v2471 = vshrl.u32 %v2470, 7
        %v2472 = vsub.s32 %v2469, %v2471
        %v2473 = vrot.slane %v2445, %v2472
        %v2474 = vcombine.low %v2452, %v2466
        %v2475 = vcombine.high %v2452, %v2466
        %v2476 = vcombine.low %v2459, %v2473
        %v2477 = vcombine.high %v2459, %v2473
        %v2486 = vadd.f32 %v2326, %v2410
        %v2487 = vadd.f32 %v2327, %v2474
        %v2488 = vadd.f32 %v2328, %v2412
        %v2489 = vadd.f32 %v2329, %v2476
        %v2490 = vadd.f32 %v2330, %v2411
        %v2491 = vadd.f32 %v2331, %v2475
        %v2492 = vadd.f32 %v2332, %v2413
        %v2493 = vadd.f32 %v2333, %v2477
        %v2502 = vcombine.low %v2486, %v2490
        %v2503 = vcombine.high %v2486, %v2490
        %v2504 = vcombine.low %v2488, %v2492
        %v2505 = vcombine.high %v2488, %v2492
        %v2507 = vunpack.c.l.s4 1935823168
        %v2508 = vunpack.c.0.s8 %v2507
        %v2509 = vlaneseq
        %v2510 = vshrl.u32 %v2509, 7
        %v2511 = vsub.s32 %v2508, %v2510
        %v2512 = vrot.slane %v2502, %v2511
        %v2514 = vunpack.c.l.s4 1935823168
        %v2515 = vunpack.c.0.s8 %v2514
        %v2516 = vlaneseq
        %v2517 = vshrl.u32 %v2516, 7
        %v2518 = vsub.s32 %v2515, %v2517
        %v2519 = vrot.slane %v2504, %v2518
        %v2521 = vunpack.c.l.s4 1935823168
        %v2522 = vunpack.c.0.s8 %v2521
        %v2523 = vlaneseq
        %v2524 = vshrl.u32 %v2523, 7
        %v2525 = vsub.s32 %v2522, %v2524
        %v2526 = vrot.slane %v2503, %v2525
        %v2528 = vunpack.c.l.s4 1935823168
        %v2529 = vunpack.c.0.s8 %v2528
        %v2530 = vlaneseq
        %v2531 = vshrl.u32 %v2530, 7
        %v2532 = vsub.s32 %v2529, %v2531
        %v2533 = vrot.slane %v2505, %v2532
        %v2534 = vcombine.low %v2512, %v2519
        %v2535 = vcombine.high %v2512, %v2519
        %v2536 = vcombine.low %v2526, %v2533
        %v2537 = vcombine.high %v2526, %v2533
        %v2539 = vunpack.c.l.s4 1935823168
        %v2540 = vunpack.c.0.s8 %v2539
        %v2541 = vlaneseq
        %v2542 = vshrl.u32 %v2541, 7
        %v2543 = vsub.s32 %v2540, %v2542
        %v2544 = vrot.slane %v2534, %v2543
        %v2546 = vunpack.c.l.s4 1935823168
        %v2547 = vunpack.c.0.s8 %v2546
        %v2548 = vlaneseq
        %v2549 = vshrl.u32 %v2548, 7
        %v2550 = vsub.s32 %v2547, %v2549
        %v2551 = vrot.slane %v2535, %v2550
        %v2553 = vunpack.c.l.s4 1935823168
        %v2554 = vunpack.c.0.s8 %v2553
        %v2555 = vlaneseq
        %v2556 = vshrl.u32 %v2555, 7
        %v2557 = vsub.s32 %v2554, %v2556
        %v2558 = vrot.slane %v2536, %v2557
        %v2560 = vunpack.c.l.s4 1935823168
        %v2561 = vunpack.c.0.s8 %v2560
        %v2562 = vlaneseq
        %v2563 = vshrl.u32 %v2562, 7
        %v2564 = vsub.s32 %v2561, %v2563
        %v2565 = vrot.slane %v2537, %v2564
        %v2566 = vcombine.low %v2487, %v2491
        %v2567 = vcombine.high %v2487, %v2491
        %v2568 = vcombine.low %v2489, %v2493
        %v2569 = vcombine.high %v2489, %v2493
        %v2571 = vunpack.c.l.s4 1935823168
        %v2572 = vunpack.c.0.s8 %v2571
        %v2573 = vlaneseq
        %v2574 = vshrl.u32 %v2573, 7
        %v2575 = vsub.s32 %v2572, %v2574
        %v2576 = vrot.slane %v2566, %v2575
        %v2578 = vunpack.c.l.s4 1935823168
        %v2579 = vunpack.c.0.s8 %v2578
        %v2580 = vlaneseq
        %v2581 = vshrl.u32 %v2580, 7
        %v2582 = vsub.s32 %v2579, %v2581
        %v2583 = vrot.slane %v2568, %v2582
        %v2585 = vunpack.c.l.s4 1935823168
        %v2586 = vunpack.c.0.s8 %v2585
        %v2587 = vlaneseq
        %v2588 = vshrl.u32 %v2587, 7
        %v2589 = vsub.s32 %v2586, %v2588
        %v2590 = vrot.slane %v2567, %v2589
        %v2592 = vunpack.c.l.s4 1935823168
        %v2593 = vunpack.c.0.s8 %v2592
        %v2594 = vlaneseq
        %v2595 = vshrl.u32 %v2594, 7
        %v2596 = vsub.s32 %v2593, %v2595
        %v2597 = vrot.slane %v2569, %v2596
        %v2598 = vcombine.low %v2576, %v2583
        %v2599 = vcombine.high %v2576, %v2583
        %v2600 = vcombine.low %v2590, %v2597
        %v2601 = vcombine.high %v2590, %v2597
        %v2603 = vunpack.c.l.s4 1935823168
        %v2604 = vunpack.c.0.s8 %v2603
        %v2605 = vlaneseq
        %v2606 = vshrl.u32 %v2605, 7
        %v2607 = vsub.s32 %v2604, %v2606
        %v2608 = vrot.slane %v2598, %v2607
        %v2610 = vunpack.c.l.s4 1935823168
        %v2611 = vunpack.c.0.s8 %v2610
        %v2612 = vlaneseq
        %v2613 = vshrl.u32 %v2612, 7
        %v2614 = vsub.s32 %v2611, %v2613
        %v2615 = vrot.slane %v2599, %v2614
        %v2617 = vunpack.c.l.s4 1935823168
        %v2618 = vunpack.c.0.s8 %v2617
        %v2619 = vlaneseq
        %v2620 = vshrl.u32 %v2619, 7
        %v2621 = vsub.s32 %v2618, %v2620
        %v2622 = vrot.slane %v2600, %v2621
        %v2624 = vunpack.c.l.s4 1935823168
        %v2625 = vunpack.c.0.s8 %v2624
        %v2626 = vlaneseq
        %v2627 = vshrl.u32 %v2626, 7
        %v2628 = vsub.s32 %v2625, %v2627
        %v2629 = vrot.slane %v2601, %v2628
        %2638 = vst [vmem:[%s366] sm:$0xff] %v2544
        %2639 = vst [vmem:[%s366 + $0x8] sm:$0xff] %v2551
        %2640 = vst [vmem:[%s366 + $0x10] sm:$0xff] %v2558
        %2641 = vst [vmem:[%s366 + $0x18] sm:$0xff] %v2565
        %2642 = vst [vmem:[%s366 + $0x20] sm:$0xff] %v2608
        %2643 = vst [vmem:[%s366 + $0x28] sm:$0xff] %v2615
        %2644 = vst [vmem:[%s366 + $0x30] sm:$0xff] %v2622
        %2645 = vst [vmem:[%s366 + $0x38] sm:$0xff] %v2629
        %s2646 = sand.u32 %s208, 1
        %s2647 = scalar_lea.sflag [#allocation4], %s2646
        %s2648 = sand.u32 %s208, 1
        %s2649 = smul.addr %s2648, 64
        %s2650 = scalar_lea.vmem [#allocation8], %s2649
        // Predicated region
        $region61: #{tpu_custom_call.1} parent=47 // pred_check
          %p2651 = pneg %p218
        $region62: #{tpu_custom_call.1} parent=47 // pred_check_branch
          %2653 = sbr.rel (%p2651) target = $region64
        $region63: #{tpu_custom_call.1} parent=47 // pred_region
          %s2654 = smul.u32 16, %s30
          %s2656 = ssub.s32 1024, 1024
          %2657 = vsyncadd %s2647, %s2656
          %s2658 = smul.addr %s29, 32
          %s2659 = sadd.s32 %s2654, %s2658
          %s2660 = smul.addr %s2659, 64
          %s2661 = scalar_lea.hbm %s7, %s2660
          %s2663 = sshll.u32 %s2650, 4
          %s2664 = int_to_ptr.vmem [resolvable:$true] %s2663
          %2666 = dma.vmem_to_hbm [thread:$0]  %s2664, 1024, %s2661, %s2647
        $region64: #{tpu_custom_call.1} parent=47 // pred_fallthru
          _
      $region48: #{tpu_custom_call.1} parent=5 // pred_fallthru
        _
      %p2667 = scmp.le.s32.totalorder 2, %s20
      // Predicated region
      $region65: #{tpu_custom_call.1} parent=5 // pred_check
        %p2668 = pneg %p2667
      $region66: #{tpu_custom_call.1} parent=5 // pred_check_branch
        %2670 = sbr.rel (%p2668) target = $region68
      $region67: #{tpu_custom_call.1} parent=5 // pred_region
        %s2671 = ssub.s32 %s20, 2
        // Predicated region
        $region69: #{tpu_custom_call.1} parent=67 // pred_check
          %p2672 = pneg %p224
        $region70: #{tpu_custom_call.1} parent=67 // pred_check_branch
          %2674 = sbr.rel (%p2672) target = $region72
        $region71: #{tpu_custom_call.1} parent=67 // pred_region
          %s2675 = sand.u32 %s209, 1
          %s2676 = scalar_lea.sflag [#allocation4], %s2675
          %s2677 = sand.u32 %s209, 1
          %s2678 = smul.addr %s2677, 64
          %s2679 = scalar_lea.vmem [#allocation8], %s2678
          %2680 = dma.done %s2676, 1024
        $region72: #{tpu_custom_call.1} parent=67 // pred_fallthru
          _
      $region68: #{tpu_custom_call.1} parent=5 // pred_fallthru
        _
    $region6: #{tpu_custom_call.1} parent=1 // loop_footer
      %s24 = sadd.s32 1, %s20
    $region7: #{tpu_custom_call.1} parent=1 // loop_footer_branch
      %19 = sbr.rel target = $region3
    $region8: #{tpu_custom_call.1} parent=1 // loop_exit
      _
    %2681 = vsyncpa [#allocation3], 1
    %s2682 = scalar_lea.sflag [#allocation3], 1
    %2683 = vsyncpa %s2682, 1
    %2684 = vsyncpa [#allocation6], 1
    %2685 = vsyncpa [#allocation4], 1
    %s2686 = scalar_lea.sflag [#allocation4], 1
    %2687 = vsyncpa %s2686, 1

</llo_original>
